<compile_context>
chip_gen: v7x
topology: tpu7x:2x2x1
jax: 0.10.0
libtpu: 0.0.40
codegen_flags: <defaults>
</compile_context>

<pallas_src>
import functools

import jax
import jax.numpy as jnp
from jax.experimental import pallas as pl
from jax.experimental.pallas import tpu as pltpu

K = 3                    # ConvTranspose2d kernel_size (fixed by the module)
BN_EPS = 1e-5            # PyTorch BatchNorm2d default eps


def _vmem_capacity_bytes():
    try:
        cap = getattr(pltpu.get_tpu_info(), "vmem_capacity_bytes", None)
        if cap:
            return int(cap)
    except Exception:
        pass
    return 128 << 20     # v5e / v6e default


def _conv_stats_kernel(x_ref, w_ref, hwok_ref, stats_ref, *,
                       th, wq, hq, needs_h_mask, needs_w_mask):
    """Pass 1, one (batch, row-block) grid step: im2col'd transposed conv as a single
    MXU matmul + per-tile BatchNorm partial sums (masked at ragged edges)."""
    i = pl.program_id(1)
    acc = jnp.dot(x_ref[...], w_ref[...], preferred_element_type=jnp.float32)
    if needs_h_mask or needs_w_mask:
        row = jax.lax.broadcasted_iota(jnp.int32, (acc.shape[0], 1), 0)
        if needs_h_mask:
            oq = i * th + row // wq                       # output phase-row index
            acc = acc * jnp.where(oq >= hq, 0.0,
                                  jnp.where(oq == hq - 1, hwok_ref[0:1, :], 1.0))
        if needs_w_mask:
            acc = acc * jnp.where(row % wq == wq - 1, hwok_ref[1:2, :], 1.0)
    stats_ref[...] = jnp.concatenate(
        [jnp.sum(acc, axis=0, keepdims=True),
         jnp.sum(acc * acc, axis=0, keepdims=True)], axis=0)


def _conv_bn_relu_kernel(x_ref, w_ref, scale_ref, shift_ref, o_ref):
    """Pass 2: recompute the matmul, apply fused BN affine + ReLU.
    Dropout2d(p=0.0) is an identity.  No mask needed: out-of-range phase positions
    are finite and get sliced away in the wrapper epilogue."""
    acc = jnp.dot(x_ref[...], w_ref[...], preferred_element_type=jnp.float32)
    o_ref[...] = jnp.maximum(acc * scale_ref[...] + shift_ref[...], 0.0
                             ).astype(o_ref.dtype)


def deconv_block_forward(x_nchw, weight, gamma, beta, *, stride, pad, output_pad,
                         compute_dtype=jnp.bfloat16, max_tile_rows=None):
    """Forward of DeConvolutionBlock.  x_nchw: (N,Cin,H,W); weight: ConvTranspose2d
    weight (Cin,Cout,3,3); gamma/beta: BatchNorm2d affine (Cout,).  Returns NCHW f32."""
    n, cin, h, w = x_nchw.shape
    cout = weight.shape[1]
    assert weight.shape == (cin, cout, K, K)
    s = int(stride)
    assert s >= 1 and 0 <= pad <= K - 1 and 0 <= output_pad < max(s, 1)

    ho = (h - 1) * s - 2 * pad + K + output_pad
    wo = (w - 1) * s - 2 * pad + K + output_pad

    # ---- static sub-pixel (phase) decomposition bookkeeping ---------------------
    pf = K - 1 - pad                                  # front pad of the dilated form
    t_lo = min(-((pf - r) // s) for r in range(s))
    t_hi = max((K - 1 + r - pf) // s for r in range(s))
    kq = t_hi - t_lo + 1                              # dense kernel on un-dilated input
    hq = -(-ho // s)                                  # output rows per phase
    wq = -(-wo // s)                                  # output cols per phase
    cd = s * s * cout                                 # phase-expanded channel count
    kc = kq * kq * cin                                # im2col contraction depth

    # ---- chip-aware tile sizing --------------------------------------------------
    vmem_cap = _vmem_capacity_bytes()
    small_vmem = vmem_cap <= (64 << 20)               # v7x-class (64 MiB per TC)
    tile_budget = (3 << 20) if small_vmem else (8 << 20)
    vmem_limit = int(min(vmem_cap * 3 // 4, 100 << 20))

    if max_tile_rows is None:
        rows_cap = max(8, tile_budget // max(1, wq * cd * 4))
    else:
        rows_cap = max(1, int(max_tile_rows))
    if hq <= rows_cap:
        th, nb = hq, 1
    else:
        th = max(8, (rows_cap // 8) * 8)              # multiple of 8 -> legal tiling
        nb = -(-hq // th)
    # v7x has 2 TensorCores per chip: make sure there are >= 2 parallel grid units.
    if n * nb < 2 and hq > 8:
        th = ((-(-hq // 2)) + 7) // 8 * 8
        nb = -(-hq // th)
    hq_pad = nb * th

    needs_h_mask = (ho % s != 0) or (hq_pad != hq)
    needs_w_mask = (wo % s != 0)

    # ---- wrapper glue: NCHW->NHWC, zero pad, phase im2col (smallest tensor) ------
    pf_sp = -t_lo
    x_nhwc = jnp.transpose(x_nchw, (0, 2, 3, 1))
    pad_back_h = max(0, hq_pad + kq - 1 - (pf_sp + h))
    pad_back_w = max(0, wq + kq - 1 - (pf_sp + w))
    x_work = jnp.pad(x_nhwc, ((0, 0), (pf_sp, pad_back_h),
                              (pf_sp, pad_back_w), (0, 0))).astype(compute_dtype)
    patches = [x_work[:, jh:jh + hq_pad, jw:jw + wq, :]
               for jh in range(kq) for jw in range(kq)]
    x_unfold = jnp.concatenate(patches, axis=-1).reshape(n, hq_pad * wq, kc)

    # Phase-expanded weight as one (kq*kq*Cin, s*s*Cout) matrix (matches im2col order).
    w_flip = jnp.transpose(weight[:, :, ::-1, ::-1], (2, 3, 0, 1))   # (K,K,Cin,Cout)
    w_sub = jnp.zeros((kq, kq, cin, s, s, cout), jnp.float32)
    for jh in range(kq):
        for rh in range(s):
            kh = s * (jh + t_lo) + pf - rh
            if not 0 <= kh < K:
                continue
            for jw in range(kq):
                for rw in range(s):
                    kw = s * (jw + t_lo) + pf - rw
                    if 0 <= kw < K:
                        w_sub = w_sub.at[jh, jw, :, rh, rw, :].set(w_flip[kh, kw])
    w_mat = w_sub.reshape(kc, cd).astype(compute_dtype)

    # Per-phase validity of the LAST phase row / col (ragged Ho, Wo vs stride).
    c_ids = jnp.arange(cd)
    h_ok = ((hq - 1) * s + c_ids // (s * cout) < ho).astype(jnp.float32)
    w_ok = ((wq - 1) * s + (c_ids // cout) % s < wo).astype(jnp.float32)
    phase_ok = jnp.stack([h_ok, w_ok])                # (2, cd)

    cparams = pltpu.CompilerParams(
        dimension_semantics=("parallel", "parallel"),
        vmem_limit_bytes=vmem_limit)

    x_spec = pl.BlockSpec((None, th * wq, kc), lambda b, i: (b, i, 0))
    w_spec = pl.BlockSpec((kc, cd), lambda b, i: (0, 0))

    # ---- pass 1: per-tile BN partial sums (conv output never hits HBM) ----------
    kern1 = functools.partial(_conv_stats_kernel, th=th, wq=wq, hq=hq,
                              needs_h_mask=needs_h_mask, needs_w_mask=needs_w_mask)
    stats = pl.pallas_call(
        kern1,
        out_shape=jax.ShapeDtypeStruct((n, nb, 2, cd), jnp.float32),
        grid=(n, nb),
        in_specs=[x_spec, w_spec,
                  pl.BlockSpec((2, cd), lambda b, i: (0, 0))],
        out_specs=pl.BlockSpec((None, None, 2, cd), lambda b, i: (b, i, 0, 0)),
        compiler_params=cparams,
    )(x_unfold, w_mat, phase_ok)

    # ---- tiny cross-tile BN reduction -> exact biased batch statistics ----------
    # TODO(synk): switch to a Chan/Welford (count, mean, M2) combination if
    # activations ever have |mean| >> std (E[x^2]-E[x]^2 cancellation in f32).
    tot = jnp.sum(stats, axis=(0, 1)).reshape(2, s * s, cout).sum(axis=1)
    count = float(n * ho * wo)
    mean = tot[0] / count
    var = jnp.maximum(tot[1] / count - mean * mean, 0.0)
    inv = jax.lax.rsqrt(var + BN_EPS)
    scale_c = gamma.astype(jnp.float32) * inv
    shift_c = beta.astype(jnp.float32) - mean * scale_c
    scale_cd = jnp.tile(scale_c, s * s).reshape(1, cd)
    shift_cd = jnp.tile(shift_c, s * s).reshape(1, cd)

    # ---- pass 2: recompute conv + fused BN affine + ReLU, BlockSpec-pipelined ----
    # TODO(synk): cd = s*s*Cout is the lane dim of the stores; pad Cout (or fold Wq
    # into the lane dim) so cd >= 128 for production shapes.
    y = pl.pallas_call(
        _conv_bn_relu_kernel,
        out_shape=jax.ShapeDtypeStruct((n, hq_pad * wq, cd), jnp.float32),
        grid=(n, nb),
        in_specs=[x_spec, w_spec,
                  pl.BlockSpec((1, cd), lambda b, i: (0, 0)),
                  pl.BlockSpec((1, cd), lambda b, i: (0, 0))],
        out_specs=pl.BlockSpec((None, th * wq, cd), lambda b, i: (b, i, 0)),
        compiler_params=cparams,
    )(x_unfold, w_mat, scale_cd, shift_cd)

    # ---- un-shuffle phases back to full resolution + NCHW for PyTorch parity ----
    # TODO(synk): fold this de-phase transpose into pass 2 (write NCHW blocks
    # directly) once the in-kernel (th,wq,s,s,Cout) relayout beats the masked stores
    # it would cost when Wo < 128.
    y6 = y.reshape(n, hq_pad, wq, s, s, cout)
    out = jnp.transpose(y6, (0, 5, 1, 3, 2, 4)).reshape(n, cout, hq_pad * s, wq * s)
    return out[:, :, :ho, :wo]


def reference_forward(x_nchw, weight, gamma, beta, *, stride, pad, output_pad):
    """Pure-JAX reference (independent codepath via lax.conv_general_dilated)."""
    w_oihw = jnp.transpose(weight[:, :, ::-1, ::-1], (1, 0, 2, 3))
    p = (K - 1 - pad, K - 1 - pad + output_pad)
    y = jax.lax.conv_general_dilated(
        x_nchw, w_oihw, window_strides=(1, 1), padding=[p, p],
        lhs_dilation=(stride, stride),
        dimension_numbers=("NCHW", "OIHW", "NCHW"))
    mean = jnp.mean(y, axis=(0, 2, 3), keepdims=True)
    var = jnp.mean((y - mean) ** 2, axis=(0, 2, 3), keepdims=True)
    yb = ((y - mean) * jax.lax.rsqrt(var + BN_EPS)
          * gamma.reshape(1, -1, 1, 1) + beta.reshape(1, -1, 1, 1))
    return jnp.maximum(yb, 0.0)


if __name__ == "__main__":
    # DeConvolutionBlock(in_c=4, out_c=8, output_pad=1, pad=1, stride=2, p=0.0)
    in_c, out_c = 4, 8
    n, h, w_sp = 2, 16, 16

    key = jax.random.PRNGKey(0)
    kx, kw_, kg, kb = jax.random.split(key, 4)
    x = jax.random.normal(kx, (n, in_c, h, w_sp), jnp.float32)
    bound = 1.0 / (in_c * K * K) ** 0.5
    weight = jax.random.uniform(kw_, (in_c, out_c, K, K), jnp.float32, -bound, bound)
    gamma = 1.0 + 0.1 * jax.random.normal(kg, (out_c,), jnp.float32)
    beta = 0.1 * jax.random.normal(kb, (out_c,), jnp.float32)

    def check(name, *, stride, pad, output_pad, compute_dtype, max_tile_rows, atol, rtol):
        fwd = jax.jit(functools.partial(
            deconv_block_forward, stride=stride, pad=pad, output_pad=output_pad,
            compute_dtype=compute_dtype, max_tile_rows=max_tile_rows))
        out = jax.block_until_ready(fwd(x, weight, gamma, beta))
        ref = reference_forward(x, weight, gamma, beta, stride=stride, pad=pad,
                                output_pad=output_pad)
        assert out.shape == ref.shape, (name, out.shape, ref.shape)
        err = float(jnp.max(jnp.abs(out - ref)))
        assert jnp.allclose(out, ref, atol=atol, rtol=rtol), (name, err)
        return out

    # 1) default path: bf16 operands + f32 accumulation, stride=2/pad=1/output_pad=1.
    check("bf16", stride=2, pad=1, output_pad=1, compute_dtype=jnp.bfloat16,
          max_tile_rows=None, atol=3e-2, rtol=3e-2)
    # 2) f32 operands: tight numerical check of the same config.
    check("f32", stride=2, pad=1, output_pad=1, compute_dtype=jnp.float32,
          max_tile_rows=None, atol=2e-4, rtol=2e-4)
    # 3) forced multi-row-block tiling + ragged Ho/Wo: exercises the cross-tile BN
    #    reduction and the separable validity mask.
    check("f32-tiled-ragged", stride=2, pad=1, output_pad=0,
          compute_dtype=jnp.float32, max_tile_rows=8, atol=2e-4, rtol=2e-4)

    print("KERNEL_OK")
</pallas_src>

<mosaic_0001>
module attributes {stable_mosaic.version = 11 : i64} {
  func.func @_conv_stats_kernel(%arg0: i32, %arg1: i32, %arg2: memref<1x256x16xbf16, #tpu.memory_space<vmem>>, %arg3: memref<16x32xbf16, #tpu.memory_space<vmem>>, %arg4: memref<2x32xf32, #tpu.memory_space<vmem>>, %arg5: memref<1x1x2x32xf32, #tpu.memory_space<vmem>>) attributes {dimension_semantics = [#tpu.dimension_semantics<parallel>, #tpu.dimension_semantics<parallel>], iteration_bounds = array<i64: 2, 1>, scalar_prefetch = 0 : i64, scratch_operands = 0 : i64, tpu.core_type = #tpu.core_type<tc>, window_params = [{transform_indices = @transform_0, window_bounds = array<i64: 1, 256, 16>}, {pipeline_mode = #tpu.pipeline_mode<synchronous>, transform_indices = @transform_1, window_bounds = array<i64: 16, 32>}, {pipeline_mode = #tpu.pipeline_mode<synchronous>, transform_indices = @transform_2, window_bounds = array<i64: 2, 32>}, {transform_indices = @transform_3, window_bounds = array<i64: 1, 1, 2, 32>}]} {
    %c0 = arith.constant 0 : index
    %c0_0 = arith.constant 0 : index
    %c0_1 = arith.constant 0 : index
    %0 = vector.load %arg2[%c0, %c0_0, %c0_1] : memref<1x256x16xbf16, #tpu.memory_space<vmem>>, vector<1x256x16xbf16>
    %1 = vector.shape_cast %0 : vector<1x256x16xbf16> to vector<256x16xbf16>
    %c0_2 = arith.constant 0 : index
    %c0_3 = arith.constant 0 : index
    %2 = vector.load %arg3[%c0_2, %c0_3] : memref<16x32xbf16, #tpu.memory_space<vmem>>, vector<16x32xbf16>
    %cst = arith.constant dense<0.000000e+00> : vector<256x32xf32>
    %3 = tpu.matmul %1, %2, %cst {dimension_numbers = #tpu.dot_dimension_numbers<[1], [0], [0], [1], [0, 0, 1, 1], [], []>} : vector<256x16xbf16>, vector<16x32xbf16>, vector<256x32xf32> -> vector<256x32xf32>
    %cst_4 = arith.constant dense<0.000000e+00> : vector<32xf32>
    %4 = vector.multi_reduction <add>, %3, %cst_4 [0] : vector<256x32xf32> to vector<32xf32>
    %5 = vector.shape_cast %4 : vector<32xf32> to vector<1x32xf32>
    %6 = arith.mulf %3, %3 : vector<256x32xf32>
    %cst_5 = arith.constant dense<0.000000e+00> : vector<32xf32>
    %7 = vector.multi_reduction <add>, %6, %cst_5 [0] : vector<256x32xf32> to vector<32xf32>
    %8 = vector.shape_cast %7 : vector<32xf32> to vector<1x32xf32>
    %9 = tpu.concatenate %5, %8 in 0 : vector<1x32xf32>, vector<1x32xf32> -> vector<2x32xf32>
    %c0_6 = arith.constant 0 : index
    %c0_7 = arith.constant 0 : index
    %c0_8 = arith.constant 0 : index
    %c0_9 = arith.constant 0 : index
    %10 = vector.load %arg5[%c0_6, %c0_7, %c0_8, %c0_9] : memref<1x1x2x32xf32, #tpu.memory_space<vmem>>, vector<1x1x2x32xf32>
    %11 = vector.shape_cast %10 : vector<1x1x2x32xf32> to vector<2x32xf32>
    %12 = vector.shape_cast %9 : vector<2x32xf32> to vector<1x1x2x32xf32>
    tpu.vector_store %arg5[%c0_6, %c0_7, %c0_8, %c0_9], %12 {strides = array<i32>} : memref<1x1x2x32xf32, #tpu.memory_space<vmem>>, vector<1x1x2x32xf32>,
    return
  }
  func.func @transform_0(%arg0: i32, %arg1: i32) -> (i32, i32, i32) {
    %c0_i32 = arith.constant 0 : i32
    %c0_i32_0 = arith.constant 0 : i32
    return %arg0, %arg1, %c0_i32 : i32, i32, i32
  }
  func.func @transform_1(%arg0: i32, %arg1: i32) -> (i32, i32) {
    %c0_i32 = arith.constant 0 : i32
    %c0_i32_0 = arith.constant 0 : i32
    %c0_i32_1 = arith.constant 0 : i32
    return %c0_i32, %c0_i32_0 : i32, i32
  }
  func.func @transform_2(%arg0: i32, %arg1: i32) -> (i32, i32) {
    %c0_i32 = arith.constant 0 : i32
    %c0_i32_0 = arith.constant 0 : i32
    %c0_i32_1 = arith.constant 0 : i32
    return %c0_i32, %c0_i32_0 : i32, i32
  }
  func.func @transform_3(%arg0: i32, %arg1: i32) -> (i32, i32, i32, i32) {
    %c0_i32 = arith.constant 0 : i32
    %c0_i32_0 = arith.constant 0 : i32
    %c0_i32_1 = arith.constant 0 : i32
    return %arg0, %arg1, %c0_i32, %c0_i32_0 : i32, i32, i32, i32
  }
}

module attributes {stable_mosaic.version = 11 : i64} {
  func.func @_conv_bn_relu_kernel(%arg0: i32, %arg1: i32, %arg2: memref<1x256x16xbf16, #tpu.memory_space<vmem>>, %arg3: memref<16x32xbf16, #tpu.memory_space<vmem>>, %arg4: memref<1x32xf32, #tpu.memory_space<vmem>>, %arg5: memref<1x32xf32, #tpu.memory_space<vmem>>, %arg6: memref<1x256x32xf32, #tpu.memory_space<vmem>>) attributes {dimension_semantics = [#tpu.dimension_semantics<parallel>, #tpu.dimension_semantics<parallel>], iteration_bounds = array<i64: 2, 1>, scalar_prefetch = 0 : i64, scratch_operands = 0 : i64, tpu.core_type = #tpu.core_type<tc>, window_params = [{transform_indices = @transform_0, window_bounds = array<i64: 1, 256, 16>}, {pipeline_mode = #tpu.pipeline_mode<synchronous>, transform_indices = @transform_1, window_bounds = array<i64: 16, 32>}, {pipeline_mode = #tpu.pipeline_mode<synchronous>, transform_indices = @transform_2, window_bounds = array<i64: 1, 32>}, {pipeline_mode = #tpu.pipeline_mode<synchronous>, transform_indices = @transform_3, window_bounds = array<i64: 1, 32>}, {transform_indices = @transform_4, window_bounds = array<i64: 1, 256, 32>}]} {
    %c0 = arith.constant 0 : index
    %c0_0 = arith.constant 0 : index
    %c0_1 = arith.constant 0 : index
    %0 = vector.load %arg2[%c0, %c0_0, %c0_1] : memref<1x256x16xbf16, #tpu.memory_space<vmem>>, vector<1x256x16xbf16>
    %1 = vector.shape_cast %0 : vector<1x256x16xbf16> to vector<256x16xbf16>
    %c0_2 = arith.constant 0 : index
    %c0_3 = arith.constant 0 : index
    %2 = vector.load %arg3[%c0_2, %c0_3] : memref<16x32xbf16, #tpu.memory_space<vmem>>, vector<16x32xbf16>
    %cst = arith.constant dense<0.000000e+00> : vector<256x32xf32>
    %3 = tpu.matmul %1, %2, %cst {dimension_numbers = #tpu.dot_dimension_numbers<[1], [0], [0], [1], [0, 0, 1, 1], [], []>} : vector<256x16xbf16>, vector<16x32xbf16>, vector<256x32xf32> -> vector<256x32xf32>
    %c0_4 = arith.constant 0 : index
    %c0_5 = arith.constant 0 : index
    %4 = vector.load %arg4[%c0_4, %c0_5] : memref<1x32xf32, #tpu.memory_space<vmem>>, vector<1x32xf32>
    %5 = vector.broadcast %4 : vector<1x32xf32> to vector<256x32xf32>
    %6 = arith.mulf %3, %5 : vector<256x32xf32>
    %c0_6 = arith.constant 0 : index
    %c0_7 = arith.constant 0 : index
    %7 = vector.load %arg5[%c0_6, %c0_7] : memref<1x32xf32, #tpu.memory_space<vmem>>, vector<1x32xf32>
    %8 = vector.broadcast %7 : vector<1x32xf32> to vector<256x32xf32>
    %9 = arith.addf %6, %8 : vector<256x32xf32>
    %cst_8 = arith.constant 0.000000e+00 : f32
    %10 = vector.broadcast %cst_8 : f32 to vector<256x32xf32>
    %11 = arith.maximumf %9, %10 : vector<256x32xf32>
    %c0_9 = arith.constant 0 : index
    %c0_10 = arith.constant 0 : index
    %c0_11 = arith.constant 0 : index
    %12 = vector.load %arg6[%c0_9, %c0_10, %c0_11] : memref<1x256x32xf32, #tpu.memory_space<vmem>>, vector<1x256x32xf32>
    %13 = vector.shape_cast %12 : vector<1x256x32xf32> to vector<256x32xf32>
    %14 = vector.shape_cast %11 : vector<256x32xf32> to vector<1x256x32xf32>
    tpu.vector_store %arg6[%c0_9, %c0_10, %c0_11], %14 {strides = array<i32>} : memref<1x256x32xf32, #tpu.memory_space<vmem>>, vector<1x256x32xf32>,
    return
  }
  func.func @transform_0(%arg0: i32, %arg1: i32) -> (i32, i32, i32) {
    %c0_i32 = arith.constant 0 : i32
    %c0_i32_0 = arith.constant 0 : i32
    return %arg0, %arg1, %c0_i32 : i32, i32, i32
  }
  func.func @transform_1(%arg0: i32, %arg1: i32) -> (i32, i32) {
    %c0_i32 = arith.constant 0 : i32
    %c0_i32_0 = arith.constant 0 : i32
    %c0_i32_1 = arith.constant 0 : i32
    return %c0_i32, %c0_i32_0 : i32, i32
  }
  func.func @transform_2(%arg0: i32, %arg1: i32) -> (i32, i32) {
    %c0_i32 = arith.constant 0 : i32
    %c0_i32_0 = arith.constant 0 : i32
    %c0_i32_1 = arith.constant 0 : i32
    return %c0_i32, %c0_i32_0 : i32, i32
  }
  func.func @transform_3(%arg0: i32, %arg1: i32) -> (i32, i32) {
    %c0_i32 = arith.constant 0 : i32
    %c0_i32_0 = arith.constant 0 : i32
    %c0_i32_1 = arith.constant 0 : i32
    return %c0_i32, %c0_i32_0 : i32, i32
  }
  func.func @transform_4(%arg0: i32, %arg1: i32) -> (i32, i32, i32) {
    %c0_i32 = arith.constant 0 : i32
    %c0_i32_0 = arith.constant 0 : i32
    return %arg0, %arg1, %c0_i32 : i32, i32, i32
  }
}

</mosaic_0001>

<llo_original>
// kernel: tile.18
$region0: #{tile.18}
  #allocation0 [shape = 's32[1]{0}', space=sflag, size = 0x4, scoped, tag = 'scoped memory for tile.18']
  %s0 = inlined_call_operand.vmem [shape: f32[8], index: 0, kind: input, shape index: {}]
  %s1 = inlined_call_operand.vmem [shape: f32[4,8], index: 1, kind: output, shape index: {}]
  // Predicated region
  $region2: #{tile.18} parent=0 // pred_check
    _
  $region3: #{tile.18} parent=0 // pred_check_branch
    %3 = sbr.rel (0) target = $region5
  $region4: #{tile.18} parent=0 // pred_region
    _
  $region5: #{tile.18} parent=0 // pred_fallthru
    _
  %v4 = vld [vmem:[%s0] ss:$0 sm:$0xff]
  %5 = vst [vmem:[%s1] sm:$0xf] %v4

// kernel: tile.19
$region0: #{tile.19}
  %s0 = inlined_call_operand.vmem [shape: f32[4,8], index: 0, kind: input, shape index: {}]
  %s1 = inlined_call_operand.hbm [shape: f32[1,32], index: 1, kind: output, shape index: {}]
  $region1: #{tile.19} parent=0
    #allocation0 [shape = 'u8[512]{0}', space=vmem, size = 0x400, scoped, tag = 'operand span for operand 1']
    #allocation1 [shape = 's32[1]{0}', space=sflag, size = 0x4, scoped, tag = 'scoped memory for tile.19']
    #allocation2 [shape = 'u8[4096]{0}', space=vmem, size = 0x1000, scoped, tag = 'scoped mem for output reshape']
    #allocation3 [shape = 'u8[4096]{0}', space=vmem, size = 0x1000, scoped, tag = 'scoped mem for input reshape']
    %2 = vsyncpa [#allocation1], 0
    %s4 = sshllo.u32 0, 4
    %v5 = vld [vmem:[%s0] sm:%s4]
    %6 = vst [vmem:[#allocation3] sm:%s4] %v5
    %v7 = vld [vmem:[#allocation3] sm:$0x1]
    %vm8 = vcmask 64512
    %9 = vst.msk [vmem:[#allocation2] sm:$0x1] %vm8, %v7
    %s10 = scalar_lea.vmem [#allocation3], 3
    %v11 = vld [vmem:[%s10] sm:$0x1]
    %12 = vrot.lane.b32.xlu0 %v11, 24
    %v13 = vpop.permute.xlu0 %12
    %vm14 = vcmask 261312
    %15 = vst.msk [vmem:[#allocation2] sm:$0x1] %vm14, %v13
    %s16 = scalar_lea.vmem [#allocation3], 2
    %v17 = vld [vmem:[%s16] sm:$0x1]
    %18 = vrot.lane.b32.xlu0 %v17, 16
    %v19 = vpop.permute.xlu0 %18
    %vm20 = vcmask 195712
    %21 = vst.msk [vmem:[#allocation2] sm:$0x1] %vm20, %v19
    %s22 = scalar_lea.vmem [#allocation3], 1
    %v23 = vld [vmem:[%s22] sm:$0x1]
    %24 = vrot.lane.b32.xlu0 %v23, 8
    %v25 = vpop.permute.xlu0 %24
    %vm26 = vcmask 130112
    %27 = vst.msk [vmem:[#allocation2] sm:$0x1] %vm26, %v25
    %s29 = sshllo.u32 0, 1
    %v31 = vld [vmem:[#allocation2] sm:%s29]
    %s32 = sshllo.u32 0, 1
    %33 = vst [vmem:[#allocation0] sm:%s32] %v31
    %s35 = ssub.s32 16, 16
    %36 = vsyncadd [#allocation1], %s35
    %s38 = sshll.u32 [#allocation0], 4
    %s39 = int_to_ptr.vmem [resolvable:$true] %s38
    %41 = dma.vmem_to_hbm [thread:$0]  %s39, 16, %s1, [#allocation1]
    %42 = dma.done [#allocation1], 16
    %43 = vsyncpa [#allocation1], 1

// kernel: deconv_block_forward.2
$region0: #{deconv_block_forward.2}
  #allocation0 [shape = 'u32[]', space=smem, size = 0x4, offset = 0x4, fixed_abs, tag = 'smem constant byte address 0x4 - core index']
  #allocation1 [shape = 'u32[144,128]{1,0:T(1,128)}', space=vmem, size = 0x12000, scoped, tag = 'internal scratch']
  %s0 = inlined_call_operand.hbm [shape: bf16[2,256,16], index: 0, kind: input, shape index: {}]
  %s1 = inlined_call_operand.hbm [shape: bf16[16,32], index: 1, kind: input, shape index: {}]
  %s2 = inlined_call_operand.hbm [shape: f32[2,32], index: 2, kind: input, shape index: {}]
  %s3 = inlined_call_operand.hbm [shape: f32[2,1,2,32], index: 3, kind: output, shape index: {}]
  %s4 = sld [smem:[#allocation0]]
  $region57: #{deconv_block_forward.2} parent=0
    _
  %s6 = ssub.s32 1, %s4
  %s7 = scalar_select 0, %s6, %s4
  $region1: #{deconv_block_forward.2} parent=0
    #allocation2 [shape = 'u8[131072]{0}', space=vmem, size = 0x20000, scoped, tag = 'input window, operand 0']
    #allocation3 [shape = 's32[2]{0}', space=sflag, size = 0x8, scoped, tag = 'scoped memory for deconv_block_forward.2']
    #allocation4 [shape = 's32[2]{0}', space=sflag, size = 0x8, scoped, tag = 'scoped memory for deconv_block_forward.2']
    #allocation5 [shape = 'u8[4096]{0}', space=vmem, size = 0x1000, scoped, tag = 'input window, operand 1, single buffered']
    #allocation6 [shape = 's32[1]{0}', space=sflag, size = 0x4, scoped, tag = 'scoped memory for deconv_block_forward.2']
    #allocation7 [shape = 'u8[1024]{0}', space=vmem, size = 0x400, scoped, tag = 'input window, operand 2, single buffered']
    #allocation8 [shape = 'u8[2048]{0}', space=vmem, size = 0x800, scoped, tag = 'output window, operand 0']
    %8 = vsyncpa [#allocation3], 0
    %s9 = scalar_lea.sflag [#allocation3], 1
    %10 = vsyncpa %s9, 0
    %11 = vsyncpa [#allocation6], 0
    %12 = vsyncpa [#allocation4], 0
    %s13 = scalar_lea.sflag [#allocation4], 1
    %14 = vsyncpa %s13, 0
    loop: start=0, step=1, limit=4
    $region2: #{deconv_block_forward.2} parent=1 // loop_pre_header
      _
    $region3: #{deconv_block_forward.2} parent=1 // loop_header
      %s16 = sphi 0, %s20
      %p17 = scmp.ge.s32.totalorder %s16, 4
      %s23 = sphi 0, %s35
      %s24 = sphi 0, %s31
      %s25 = sphi 0, %s23
      %s26 = sphi 0, %s24
      %s27 = sphi 0, %s25
      %s28 = sphi 0, %s26
      %s40 = sphi 0, %s42
      %s43 = sphi 0, %s40
      %s44 = sphi 0, %s43
      %s60 = sphi 0, %s44
      %s64 = sphi 0, %s64
      %s66 = sphi 0, %s64
      %s67 = sphi 0, %s66
      %s81 = sphi 0, %s67
      %s85 = sphi 0, %s85
      %s87 = sphi 0, %s85
      %s88 = sphi 0, %s87
      %s102 = sphi 0, %s88
      %s110 = sphi 0, %s112
      %s113 = sphi 0, %s110
      %s114 = sphi 0, %s113
      %s130 = sphi 0, %s114
    $region4: #{deconv_block_forward.2} parent=1 // loop_header_branch
      %19 = sbr.rel (%p17) target = $region8
    $region5: #{deconv_block_forward.2} parent=1 // loop_body
      %s21 = ssub.s32 %s16, 1
      %s22 = ssub.s32 %s16, 2
      %s29 = sadd.s32 1, %s24
      %p30 = scmp.ge.s32.totalorder %s29, 1
      %s31 = scalar_select %p30, 0, %s29
      %s32 = sadd.s32 1, %s23
      %s33 = scalar_select %p30, %s32, %s23
      %p34 = scmp.ge.s32.totalorder %s33, 2
      %s35 = scalar_select %p34, 0, %s33
      %s36 = ssub.s32 %s23, %s35
      %s37 = ssub.s32 %s24, %s31
      %s38 = sor.u32 %s36, %s37
      %p39 = scmp.eq.s32.totalorder %s38, 0
      %s41 = sadd.s32 %s40, 1
      %s42 = scalar_select %p39, %s40, %s41
      %p45 = pneg %p39
      %p46 = scmp.eq.s32.totalorder %s16, 1
      %p47 = por %p45, %p46
      %p48 = scmp.ne.s32.totalorder %s40, %s43
      %p49 = scmp.eq.s32.totalorder %s16, 0
      %p50 = por %p48, %p49
      %p51 = scmp.ne.s32.totalorder %s40, %s43
      %p52 = scmp.eq.s32.totalorder %s21, 1
      %p53 = por %p51, %p52
      %p54 = scmp.ne.s32.totalorder %s43, %s44
      %p55 = scmp.eq.s32.totalorder %s21, 0
      %p56 = por %p54, %p55
      %p57 = scmp.ne.s32.totalorder %s43, %s44
      %p58 = scmp.eq.s32.totalorder %s22, 1
      %p59 = por %p57, %p58
      %p61 = scmp.ne.s32.totalorder %s44, %s60
      %p62 = scmp.eq.s32.totalorder %s22, 0
      %p63 = por %p61, %p62
      %s65 = sadd.s32 %s64, 1
      %p68 = scmp.eq.s32.totalorder %s16, 1
      %p69 = scmp.ne.s32.totalorder %s64, %s66
      %p70 = scmp.eq.s32.totalorder %s16, 0
      %p71 = por %p69, %p70
      %p72 = scmp.ne.s32.totalorder %s64, %s66
      %p73 = scmp.eq.s32.totalorder %s21, 1
      %p74 = por %p72, %p73
      %p75 = scmp.ne.s32.totalorder %s66, %s67
      %p76 = scmp.eq.s32.totalorder %s21, 0
      %p77 = por %p75, %p76
      %p78 = scmp.ne.s32.totalorder %s66, %s67
      %p79 = scmp.eq.s32.totalorder %s22, 1
      %p80 = por %p78, %p79
      %p82 = scmp.ne.s32.totalorder %s67, %s81
      %p83 = scmp.eq.s32.totalorder %s22, 0
      %p84 = por %p82, %p83
      %s86 = sadd.s32 %s85, 1
      %p89 = scmp.eq.s32.totalorder %s16, 1
      %p90 = scmp.ne.s32.totalorder %s85, %s87
      %p91 = scmp.eq.s32.totalorder %s16, 0
      %p92 = por %p90, %p91
      %p93 = scmp.ne.s32.totalorder %s85, %s87
      %p94 = scmp.eq.s32.totalorder %s21, 1
      %p95 = por %p93, %p94
      %p96 = scmp.ne.s32.totalorder %s87, %s88
      %p97 = scmp.eq.s32.totalorder %s21, 0
      %p98 = por %p96, %p97
      %p99 = scmp.ne.s32.totalorder %s87, %s88
      %p100 = scmp.eq.s32.totalorder %s22, 1
      %p101 = por %p99, %p100
      %p103 = scmp.ne.s32.totalorder %s88, %s102
      %p104 = scmp.eq.s32.totalorder %s22, 0
      %p105 = por %p103, %p104
      %s106 = ssub.s32 %s23, %s35
      %s107 = ssub.s32 %s24, %s31
      %s108 = sor.u32 %s106, %s107
      %p109 = scmp.eq.s32.totalorder %s108, 0
      %s111 = sadd.s32 %s110, 1
      %s112 = scalar_select %p109, %s110, %s111
      %p115 = pneg %p109
      %p116 = scmp.eq.s32.totalorder %s16, 1
      %p117 = por %p115, %p116
      %p118 = scmp.ne.s32.totalorder %s110, %s113
      %p119 = scmp.eq.s32.totalorder %s16, 0
      %p120 = por %p118, %p119
      %p121 = scmp.ne.s32.totalorder %s110, %s113
      %p122 = scmp.eq.s32.totalorder %s21, 1
      %p123 = por %p121, %p122
      %p124 = scmp.ne.s32.totalorder %s113, %s114
      %p125 = scmp.eq.s32.totalorder %s21, 0
      %p126 = por %p124, %p125
      %p127 = scmp.ne.s32.totalorder %s113, %s114
      %p128 = scmp.eq.s32.totalorder %s22, 1
      %p129 = por %p127, %p128
      %p131 = scmp.ne.s32.totalorder %s114, %s130
      %p132 = scmp.eq.s32.totalorder %s22, 0
      %p133 = por %p131, %p132
      %p134 = scmp.le.s32.totalorder 1, %s16
      %p135 = scmp.lt.s32.totalorder %s16, 3
      %p136 = pnand %p134, %p135
      %p137 = pneg %p136
      // Predicated region
      $region9: #{deconv_block_forward.2} parent=5 // pred_check
        _
      $region10: #{deconv_block_forward.2} parent=5 // pred_check_branch
        %139 = sbr.rel (%p136) target = $region12
      $region11: #{deconv_block_forward.2} parent=5 // pred_region
        %s140 = ssub.s32 %s16, 1
        // Predicated region
        $region13: #{deconv_block_forward.2} parent=11 // pred_check
          %p141 = pneg %p77
        $region14: #{deconv_block_forward.2} parent=11 // pred_check_branch
          %143 = sbr.rel (%p141) target = $region16
        $region15: #{deconv_block_forward.2} parent=11 // pred_region
          %s145 = ssub.s32 128, 128
          %146 = vsyncadd [#allocation6], %s145
          %s147 = sshll.u32 [#allocation5], 4
          %s148 = int_to_ptr.vmem [resolvable:$true] %s147
          %153 = dma.hbm_to_vmem [thread:$0]  %s1, 128, %s148, [#allocation6], 64, 64, 4
        $region16: #{deconv_block_forward.2} parent=11 // pred_fallthru
          _
        // Predicated region
        $region17: #{deconv_block_forward.2} parent=11 // pred_check
          %p154 = pneg %p98
        $region18: #{deconv_block_forward.2} parent=11 // pred_check_branch
          %156 = sbr.rel (%p154) target = $region20
        $region19: #{deconv_block_forward.2} parent=11 // pred_region
          %s158 = ssub.s32 32, 32
          %159 = vsyncadd [#allocation6], %s158
          %s161 = sshll.u32 [#allocation7], 4
          %s162 = int_to_ptr.vmem [resolvable:$true] %s161
          %164 = dma.hbm_to_vmem [thread:$0]  %s2, 32, %s162, [#allocation6]
        $region20: #{deconv_block_forward.2} parent=11 // pred_fallthru
          _
      $region12: #{deconv_block_forward.2} parent=5 // pred_fallthru
        _
      %p165 = scmp.lt.s32.totalorder %s16, 2
      // Predicated region
      $region21: #{deconv_block_forward.2} parent=5 // pred_check
        %p166 = pneg %p165
      $region22: #{deconv_block_forward.2} parent=5 // pred_check_branch
        %168 = sbr.rel (%p166) target = $region24
      $region23: #{deconv_block_forward.2} parent=5 // pred_region
        // Predicated region
        $region25: #{deconv_block_forward.2} parent=23 // pred_check
          %p169 = pneg %p50
        $region26: #{deconv_block_forward.2} parent=23 // pred_check_branch
          %171 = sbr.rel (%p169) target = $region28
        $region27: #{deconv_block_forward.2} parent=23 // pred_region
          %s172 = sand.u32 %s40, 1
          %s173 = scalar_lea.sflag [#allocation3], %s172
          %s174 = sand.u32 %s40, 1
          %s175 = smul.addr %s174, 128
          %s176 = scalar_lea.vmem [#allocation2], %s175
          %s177 = smul.u32 32, %s24
          %s179 = ssub.s32 2048, 2048
          %180 = vsyncadd %s173, %s179
          %s181 = smul.addr %s23, 32
          %s182 = sadd.s32 %s177, %s181
          %s183 = smul.addr %s182, 64
          %s184 = scalar_lea.hbm %s0, %s183
          %s185 = sshll.u32 %s176, 4
          %s186 = int_to_ptr.vmem [resolvable:$true] %s185
          %191 = dma.hbm_to_vmem [thread:$0]  %s184, 2048, %s186, %s173, 64, 64, 4
        $region28: #{deconv_block_forward.2} parent=23 // pred_fallthru
          _
      $region24: #{deconv_block_forward.2} parent=5 // pred_fallthru
        _
      %p192 = scmp.le.s32.totalorder 1, %s16
      %p193 = scmp.lt.s32.totalorder %s16, 3
      %p194 = pnand %p192, %p193
      %p195 = pneg %p194
      // Predicated region
      $region29: #{deconv_block_forward.2} parent=5 // pred_check
        _
      $region30: #{deconv_block_forward.2} parent=5 // pred_check_branch
        %197 = sbr.rel (%p194) target = $region32
      $region31: #{deconv_block_forward.2} parent=5 // pred_region
        %s198 = ssub.s32 %s16, 1
        %s199 = sand.u32 %s43, 1
        %s200 = scalar_lea.sflag [#allocation3], %s199
        %s201 = sand.u32 %s43, 1
        %s202 = smul.addr %s201, 128
        %s203 = scalar_lea.vmem [#allocation2], %s202
        // Predicated region
        $region33: #{deconv_block_forward.2} parent=31 // pred_check
          %p204 = pneg %p56
        $region34: #{deconv_block_forward.2} parent=31 // pred_check_branch
          %206 = sbr.rel (%p204) target = $region36
        $region35: #{deconv_block_forward.2} parent=31 // pred_region
          %207 = dma.done %s200, 2048
        $region36: #{deconv_block_forward.2} parent=31 // pred_fallthru
          _
        // Predicated region
        $region37: #{deconv_block_forward.2} parent=31 // pred_check
          %p208 = pneg %p77
        $region38: #{deconv_block_forward.2} parent=31 // pred_check_branch
          %210 = sbr.rel (%p208) target = $region40
        $region39: #{deconv_block_forward.2} parent=31 // pred_region
          %211 = dma.done [#allocation6], 128
        $region40: #{deconv_block_forward.2} parent=31 // pred_fallthru
          _
        // Predicated region
        $region41: #{deconv_block_forward.2} parent=31 // pred_check
          %p212 = pneg %p98
        $region42: #{deconv_block_forward.2} parent=31 // pred_check_branch
          %214 = sbr.rel (%p212) target = $region44
        $region43: #{deconv_block_forward.2} parent=31 // pred_region
          %215 = dma.done [#allocation6], 32
        $region44: #{deconv_block_forward.2} parent=31 // pred_fallthru
          _
        %s216 = sand.u32 %s43, 1
        %s217 = scalar_lea.sflag [#allocation3], %s216
        %s218 = sand.u32 %s43, 1
        %s219 = smul.addr %s218, 128
        %s220 = scalar_lea.vmem [#allocation2], %s219
        %p221 = pneg %p56
        %p222 = pneg %p53
        %p223 = pneg %p77
        %p224 = pneg %p74
        %p225 = pneg %p98
        %p226 = pneg %p95
        %p227 = pneg %p126
        %p228 = pneg %p123
        %s229 = sand.u32 %s113, 1
        %s230 = scalar_lea.sflag [#allocation4], %s229
        %s231 = sand.u32 %s113, 1
        %s232 = smul.addr %s231, 2
        %s233 = scalar_lea.vmem [#allocation8], %s232
        %s234 = smul.u32 32, %s26
        %v236 = vld [vmem:[%s203] sm:$0xf]
        %v237 = vld [vmem:[%s203 + $0x4] sm:$0xf]
        %v238 = vld [vmem:[%s203 + $0x8] sm:$0xf]
        %v239 = vld [vmem:[%s203 + $0xc] sm:$0xf]
        %v240 = vld [vmem:[%s203 + $0x10] sm:$0xf]
        %v241 = vld [vmem:[%s203 + $0x14] sm:$0xf]
        %v242 = vld [vmem:[%s203 + $0x18] sm:$0xf]
        %v243 = vld [vmem:[%s203 + $0x1c] sm:$0xf]
        %v244 = vld [vmem:[%s203 + $0x20] sm:$0xf]
        %v245 = vld [vmem:[%s203 + $0x24] sm:$0xf]
        %v246 = vld [vmem:[%s203 + $0x28] sm:$0xf]
        %v247 = vld [vmem:[%s203 + $0x2c] sm:$0xf]
        %v248 = vld [vmem:[%s203 + $0x30] sm:$0xf]
        %v249 = vld [vmem:[%s203 + $0x34] sm:$0xf]
        %v250 = vld [vmem:[%s203 + $0x38] sm:$0xf]
        %v251 = vld [vmem:[%s203 + $0x3c] sm:$0xf]
        %v252 = vld [vmem:[%s203 + $0x40] sm:$0xf]
        %v253 = vld [vmem:[%s203 + $0x44] sm:$0xf]
        %v254 = vld [vmem:[%s203 + $0x48] sm:$0xf]
        %v255 = vld [vmem:[%s203 + $0x4c] sm:$0xf]
        %v256 = vld [vmem:[%s203 + $0x50] sm:$0xf]
        %v257 = vld [vmem:[%s203 + $0x54] sm:$0xf]
        %v258 = vld [vmem:[%s203 + $0x58] sm:$0xf]
        %v259 = vld [vmem:[%s203 + $0x5c] sm:$0xf]
        %v260 = vld [vmem:[%s203 + $0x60] sm:$0xf]
        %v261 = vld [vmem:[%s203 + $0x64] sm:$0xf]
        %v262 = vld [vmem:[%s203 + $0x68] sm:$0xf]
        %v263 = vld [vmem:[%s203 + $0x6c] sm:$0xf]
        %v264 = vld [vmem:[%s203 + $0x70] sm:$0xf]
        %v265 = vld [vmem:[%s203 + $0x74] sm:$0xf]
        %v266 = vld [vmem:[%s203 + $0x78] sm:$0xf]
        %v267 = vld [vmem:[%s203 + $0x7c] sm:$0xf]
        %v268 = vld [vmem:[#allocation5] sm:$0xf]
        %v269 = vld [vmem:[#allocation5 + $0x4] sm:$0xf]
        %v302 = vunpack.c.l.b16 %v236
        %v303 = vunpack.c.l.b16 %v237
        %v304 = vunpack.c.l.b16 %v238
        %v305 = vunpack.c.l.b16 %v239
        %v306 = vunpack.c.l.b16 %v240
        %v307 = vunpack.c.l.b16 %v241
        %v308 = vunpack.c.l.b16 %v242
        %v309 = vunpack.c.l.b16 %v243
        %v310 = vunpack.c.l.b16 %v244
        %v311 = vunpack.c.l.b16 %v245
        %v312 = vunpack.c.l.b16 %v246
        %v313 = vunpack.c.l.b16 %v247
        %v314 = vunpack.c.l.b16 %v248
        %v315 = vunpack.c.l.b16 %v249
        %v316 = vunpack.c.l.b16 %v250
        %v317 = vunpack.c.l.b16 %v251
        %v318 = vunpack.c.l.b16 %v252
        %v319 = vunpack.c.l.b16 %v253
        %v320 = vunpack.c.l.b16 %v254
        %v321 = vunpack.c.l.b16 %v255
        %v322 = vunpack.c.l.b16 %v256
        %v323 = vunpack.c.l.b16 %v257
        %v324 = vunpack.c.l.b16 %v258
        %v325 = vunpack.c.l.b16 %v259
        %v326 = vunpack.c.l.b16 %v260
        %v327 = vunpack.c.l.b16 %v261
        %v328 = vunpack.c.l.b16 %v262
        %v329 = vunpack.c.l.b16 %v263
        %v330 = vunpack.c.l.b16 %v264
        %v331 = vunpack.c.l.b16 %v265
        %v332 = vunpack.c.l.b16 %v266
        %v333 = vunpack.c.l.b16 %v267
        %v334 = vpack.c.b16 %v303, %v302
        %v335 = vpack.c.b16 %v305, %v304
        %v336 = vpack.c.b16 %v307, %v306
        %v337 = vpack.c.b16 %v309, %v308
        %v338 = vpack.c.b16 %v311, %v310
        %v339 = vpack.c.b16 %v313, %v312
        %v340 = vpack.c.b16 %v315, %v314
        %v341 = vpack.c.b16 %v317, %v316
        %v342 = vpack.c.b16 %v319, %v318
        %v343 = vpack.c.b16 %v321, %v320
        %v344 = vpack.c.b16 %v323, %v322
        %v345 = vpack.c.b16 %v325, %v324
        %v346 = vpack.c.b16 %v327, %v326
        %v347 = vpack.c.b16 %v329, %v328
        %v348 = vpack.c.b16 %v331, %v330
        %v349 = vpack.c.b16 %v333, %v332
        %v352 = vunpack.c.l.b16 %v268
        %v353 = vunpack.c.l.b16 %v269
        %v354 = vpack.c.b16 %v353, %v352
        %vm356 = vcmask 130048
        %v358 = vsel %vm356, %v334, 0
        %v361 = vsel %vm356, %v335, 0
        %v364 = vsel %vm356, %v336, 0
        %v367 = vsel %vm356, %v337, 0
        %v370 = vsel %vm356, %v338, 0
        %v373 = vsel %vm356, %v339, 0
        %v376 = vsel %vm356, %v340, 0
        %v379 = vsel %vm356, %v341, 0
        %v382 = vsel %vm356, %v342, 0
        %v385 = vsel %vm356, %v343, 0
        %v388 = vsel %vm356, %v344, 0
        %v391 = vsel %vm356, %v345, 0
        %v394 = vsel %vm356, %v346, 0
        %v397 = vsel %vm356, %v347, 0
        %v400 = vsel %vm356, %v348, 0
        %v403 = vsel %vm356, %v349, 0
        %405 = vmatprep.subr.bf16.mxu0 0
        %406 = vmatpush1.bf16.msra.mxu0 %v354
        %407 = vmatprep.subr.bf16.mxu0 0
        %408 = vmatpush1.bf16.msra.mxu0 0
        %409 = vmatprep.subr.bf16.mxu0 0
        %410 = vmatpush1.bf16.msra.mxu0 0
        %411 = vmatprep.subr.bf16.mxu0 0
        %412 = vmatpush1.bf16.msra.mxu0 0
        %413 = vmatprep.subr.bf16.mxu0 0
        %414 = vmatpush1.bf16.msra.mxu0 0
        %415 = vmatprep.subr.bf16.mxu0 0
        %416 = vmatpush1.bf16.msra.mxu0 0
        %417 = vmatprep.subr.bf16.mxu0 0
        %418 = vmatpush1.bf16.msra.mxu0 0
        %419 = vmatprep.subr.bf16.mxu0 0
        %420 = vmatpush1.bf16.msra.mxu0 0
        %421 = vmatprep.subr.bf16.mxu0 0
        %422 = vmatpush1.bf16.msra.mxu0 0
        %423 = vmatprep.subr.bf16.mxu0 0
        %424 = vmatpush1.bf16.msra.mxu0 0
        %425 = vmatprep.subr.bf16.mxu0 0
        %426 = vmatpush1.bf16.msra.mxu0 0
        %427 = vmatprep.subr.bf16.mxu0 0
        %428 = vmatpush1.bf16.msra.mxu0 0
        %429 = vmatprep.subr.bf16.mxu0 0
        %430 = vmatpush1.bf16.msra.mxu0 0
        %431 = vmatprep.subr.bf16.mxu0 0
        %432 = vmatpush1.bf16.msra.mxu0 0
        %433 = vmatprep.subr.bf16.mxu0 0
        %434 = vmatpush1.bf16.msra.mxu0 0
        %435 = vmatprep.subr.bf16.mxu0 0
        %436 = vmatpush1.bf16.msra.mxu0 0
        %437 = vmatprep.mubr.bf16.mxu0 0
        %438 = vmatmul.mubr.bf16.gmra.mrb[0].mxu0 %v358
        %v439 = vpop.f32.mrb[0].mxu0
        %v440 = vadd.f32 0.0, %v439
        %v441 = vpop.f32.mrb[0].mxu0
        %v442 = vpop.f32.mrb[0].mxu0
        %v443 = vadd.f32 0.0, %v442
        %v444 = vpop.f32.mrb[0].mxu0
        %445 = vmatprep.mubr.bf16.mxu0 0
        %446 = vmatmul.mubr.bf16.gmra.mrb[0].mxu0 %v361
        %v447 = vpop.f32.mrb[0].mxu0
        %v448 = vadd.f32 0.0, %v447
        %v449 = vpop.f32.mrb[0].mxu0
        %v450 = vpop.f32.mrb[0].mxu0
        %v451 = vadd.f32 0.0, %v450
        %v452 = vpop.f32.mrb[0].mxu0
        %453 = vmatprep.mubr.bf16.mxu0 0
        %454 = vmatmul.mubr.bf16.gmra.mrb[0].mxu0 %v364
        %v455 = vpop.f32.mrb[0].mxu0
        %v456 = vadd.f32 0.0, %v455
        %v457 = vpop.f32.mrb[0].mxu0
        %v458 = vpop.f32.mrb[0].mxu0
        %v459 = vadd.f32 0.0, %v458
        %v460 = vpop.f32.mrb[0].mxu0
        %461 = vmatprep.mubr.bf16.mxu0 0
        %462 = vmatmul.mubr.bf16.gmra.mrb[0].mxu0 %v367
        %v463 = vpop.f32.mrb[0].mxu0
        %v464 = vadd.f32 0.0, %v463
        %v465 = vpop.f32.mrb[0].mxu0
        %v466 = vpop.f32.mrb[0].mxu0
        %v467 = vadd.f32 0.0, %v466
        %v468 = vpop.f32.mrb[0].mxu0
        %469 = vmatprep.mubr.bf16.mxu0 0
        %470 = vmatmul.mubr.bf16.gmra.mrb[0].mxu0 %v370
        %v471 = vpop.f32.mrb[0].mxu0
        %v472 = vadd.f32 0.0, %v471
        %v473 = vpop.f32.mrb[0].mxu0
        %v474 = vpop.f32.mrb[0].mxu0
        %v475 = vadd.f32 0.0, %v474
        %v476 = vpop.f32.mrb[0].mxu0
        %477 = vmatprep.mubr.bf16.mxu0 0
        %478 = vmatmul.mubr.bf16.gmra.mrb[0].mxu0 %v373
        %v479 = vpop.f32.mrb[0].mxu0
        %v480 = vadd.f32 0.0, %v479
        %v481 = vpop.f32.mrb[0].mxu0
        %v482 = vpop.f32.mrb[0].mxu0
        %v483 = vadd.f32 0.0, %v482
        %v484 = vpop.f32.mrb[0].mxu0
        %485 = vmatprep.mubr.bf16.mxu0 0
        %486 = vmatmul.mubr.bf16.gmra.mrb[0].mxu0 %v376
        %v487 = vpop.f32.mrb[0].mxu0
        %v488 = vadd.f32 0.0, %v487
        %v489 = vpop.f32.mrb[0].mxu0
        %v490 = vpop.f32.mrb[0].mxu0
        %v491 = vadd.f32 0.0, %v490
        %v492 = vpop.f32.mrb[0].mxu0
        %493 = vmatprep.mubr.bf16.mxu0 0
        %494 = vmatmul.mubr.bf16.gmra.mrb[0].mxu0 %v379
        %v495 = vpop.f32.mrb[0].mxu0
        %v496 = vadd.f32 0.0, %v495
        %v497 = vpop.f32.mrb[0].mxu0
        %v498 = vpop.f32.mrb[0].mxu0
        %v499 = vadd.f32 0.0, %v498
        %v500 = vpop.f32.mrb[0].mxu0
        %501 = vmatprep.mubr.bf16.mxu0 0
        %502 = vmatmul.mubr.bf16.gmra.mrb[0].mxu0 %v382
        %v503 = vpop.f32.mrb[0].mxu0
        %v504 = vadd.f32 0.0, %v503
        %v505 = vpop.f32.mrb[0].mxu0
        %v506 = vpop.f32.mrb[0].mxu0
        %v507 = vadd.f32 0.0, %v506
        %v508 = vpop.f32.mrb[0].mxu0
        %509 = vmatprep.mubr.bf16.mxu0 0
        %510 = vmatmul.mubr.bf16.gmra.mrb[0].mxu0 %v385
        %v511 = vpop.f32.mrb[0].mxu0
        %v512 = vadd.f32 0.0, %v511
        %v513 = vpop.f32.mrb[0].mxu0
        %v514 = vpop.f32.mrb[0].mxu0
        %v515 = vadd.f32 0.0, %v514
        %v516 = vpop.f32.mrb[0].mxu0
        %517 = vmatprep.mubr.bf16.mxu0 0
        %518 = vmatmul.mubr.bf16.gmra.mrb[0].mxu0 %v388
        %v519 = vpop.f32.mrb[0].mxu0
        %v520 = vadd.f32 0.0, %v519
        %v521 = vpop.f32.mrb[0].mxu0
        %v522 = vpop.f32.mrb[0].mxu0
        %v523 = vadd.f32 0.0, %v522
        %v524 = vpop.f32.mrb[0].mxu0
        %525 = vmatprep.mubr.bf16.mxu0 0
        %526 = vmatmul.mubr.bf16.gmra.mrb[0].mxu0 %v391
        %v527 = vpop.f32.mrb[0].mxu0
        %v528 = vadd.f32 0.0, %v527
        %v529 = vpop.f32.mrb[0].mxu0
        %v530 = vpop.f32.mrb[0].mxu0
        %v531 = vadd.f32 0.0, %v530
        %v532 = vpop.f32.mrb[0].mxu0
        %533 = vmatprep.mubr.bf16.mxu0 0
        %534 = vmatmul.mubr.bf16.gmra.mrb[0].mxu0 %v394
        %v535 = vpop.f32.mrb[0].mxu0
        %v536 = vadd.f32 0.0, %v535
        %v537 = vpop.f32.mrb[0].mxu0
        %v538 = vpop.f32.mrb[0].mxu0
        %v539 = vadd.f32 0.0, %v538
        %v540 = vpop.f32.mrb[0].mxu0
        %541 = vmatprep.mubr.bf16.mxu0 0
        %542 = vmatmul.mubr.bf16.gmra.mrb[0].mxu0 %v397
        %v543 = vpop.f32.mrb[0].mxu0
        %v544 = vadd.f32 0.0, %v543
        %v545 = vpop.f32.mrb[0].mxu0
        %v546 = vpop.f32.mrb[0].mxu0
        %v547 = vadd.f32 0.0, %v546
        %v548 = vpop.f32.mrb[0].mxu0
        %549 = vmatprep.mubr.bf16.mxu0 0
        %550 = vmatmul.mubr.bf16.gmra.mrb[0].mxu0 %v400
        %v551 = vpop.f32.mrb[0].mxu0
        %v552 = vadd.f32 0.0, %v551
        %v553 = vpop.f32.mrb[0].mxu0
        %v554 = vpop.f32.mrb[0].mxu0
        %v555 = vadd.f32 0.0, %v554
        %v556 = vpop.f32.mrb[0].mxu0
        %557 = vmatprep.mubr.bf16.mxu0 0
        %558 = vmatmul.mubr.bf16.gmra.mrb[0].mxu0 %v403
        %v559 = vpop.f32.mrb[0].mxu0
        %v560 = vadd.f32 0.0, %v559
        %v561 = vpop.f32.mrb[0].mxu0
        %v562 = vpop.f32.mrb[0].mxu0
        %v563 = vadd.f32 0.0, %v562
        %v564 = vpop.f32.mrb[0].mxu0
        %565 = vdwg.mxu0
        %vm566 = vcmask 261120
        %v567 = vsel %vm566, %v440, 0.0
        %v568 = vsel %vm566, %v443, 0.0
        %v569 = vadd.f32 %v567, %v568
        %v570 = vsel %vm566, %v448, 0.0
        %v571 = vadd.f32 %v569, %v570
        %v572 = vsel %vm566, %v451, 0.0
        %v573 = vadd.f32 %v571, %v572
        %v574 = vsel %vm566, %v456, 0.0
        %v575 = vadd.f32 %v573, %v574
        %v576 = vsel %vm566, %v459, 0.0
        %v577 = vadd.f32 %v575, %v576
        %v578 = vsel %vm566, %v464, 0.0
        %v579 = vadd.f32 %v577, %v578
        %v580 = vsel %vm566, %v467, 0.0
        %v581 = vadd.f32 %v579, %v580
        %v582 = vsel %vm566, %v472, 0.0
        %v583 = vadd.f32 %v581, %v582
        %v584 = vsel %vm566, %v475, 0.0
        %v585 = vadd.f32 %v583, %v584
        %v586 = vsel %vm566, %v480, 0.0
        %v587 = vadd.f32 %v585, %v586
        %v588 = vsel %vm566, %v483, 0.0
        %v589 = vadd.f32 %v587, %v588
        %v590 = vsel %vm566, %v488, 0.0
        %v591 = vadd.f32 %v589, %v590
        %v592 = vsel %vm566, %v491, 0.0
        %v593 = vadd.f32 %v591, %v592
        %v594 = vsel %vm566, %v496, 0.0
        %v595 = vadd.f32 %v593, %v594
        %v596 = vsel %vm566, %v499, 0.0
        %v597 = vadd.f32 %v595, %v596
        %v598 = vsel %vm566, %v504, 0.0
        %v599 = vadd.f32 %v597, %v598
        %v600 = vsel %vm566, %v507, 0.0
        %v601 = vadd.f32 %v599, %v600
        %v602 = vsel %vm566, %v512, 0.0
        %v603 = vadd.f32 %v601, %v602
        %v604 = vsel %vm566, %v515, 0.0
        %v605 = vadd.f32 %v603, %v604
        %v606 = vsel %vm566, %v520, 0.0
        %v607 = vadd.f32 %v605, %v606
        %v608 = vsel %vm566, %v523, 0.0
        %v609 = vadd.f32 %v607, %v608
        %v610 = vsel %vm566, %v528, 0.0
        %v611 = vadd.f32 %v609, %v610
        %v612 = vsel %vm566, %v531, 0.0
        %v613 = vadd.f32 %v611, %v612
        %v614 = vsel %vm566, %v536, 0.0
        %v615 = vadd.f32 %v613, %v614
        %v616 = vsel %vm566, %v539, 0.0
        %v617 = vadd.f32 %v615, %v616
        %v618 = vsel %vm566, %v544, 0.0
        %v619 = vadd.f32 %v617, %v618
        %v620 = vsel %vm566, %v547, 0.0
        %v621 = vadd.f32 %v619, %v620
        %v622 = vsel %vm566, %v552, 0.0
        %v623 = vadd.f32 %v621, %v622
        %v624 = vsel %vm566, %v555, 0.0
        %v625 = vadd.f32 %v623, %v624
        %v626 = vsel %vm566, %v560, 0.0
        %v627 = vadd.f32 %v625, %v626
        %v628 = vsel %vm566, %v563, 0.0
        %v629 = vadd.f32 %v627, %v628
        %v630 = vrot.slane %v629, 4
        %v631 = vadd.f32 %v629, %v630
        %v632 = vrot.slane %v631, 2
        %v633 = vadd.f32 %v631, %v632
        %v634 = vrot.slane %v633, 1
        %v635 = vadd.f32 %v633, %v634
        %v636 = vmul.f32 %v440, %v440
        %v637 = vmul.f32 %v443, %v443
        %v638 = vmul.f32 %v448, %v448
        %v639 = vmul.f32 %v451, %v451
        %v640 = vmul.f32 %v456, %v456
        %v641 = vmul.f32 %v459, %v459
        %v642 = vmul.f32 %v464, %v464
        %v643 = vmul.f32 %v467, %v467
        %v644 = vmul.f32 %v472, %v472
        %v645 = vmul.f32 %v475, %v475
        %v646 = vmul.f32 %v480, %v480
        %v647 = vmul.f32 %v483, %v483
        %v648 = vmul.f32 %v488, %v488
        %v649 = vmul.f32 %v491, %v491
        %v650 = vmul.f32 %v496, %v496
        %v651 = vmul.f32 %v499, %v499
        %v652 = vmul.f32 %v504, %v504
        %v653 = vmul.f32 %v507, %v507
        %v654 = vmul.f32 %v512, %v512
        %v655 = vmul.f32 %v515, %v515
        %v656 = vmul.f32 %v520, %v520
        %v657 = vmul.f32 %v523, %v523
        %v658 = vmul.f32 %v528, %v528
        %v659 = vmul.f32 %v531, %v531
        %v660 = vmul.f32 %v536, %v536
        %v661 = vmul.f32 %v539, %v539
        %v662 = vmul.f32 %v544, %v544
        %v663 = vmul.f32 %v547, %v547
        %v664 = vmul.f32 %v552, %v552
        %v665 = vmul.f32 %v555, %v555
        %v666 = vmul.f32 %v560, %v560
        %v667 = vmul.f32 %v563, %v563
        %v668 = vsel %vm566, %v636, 0.0
        %v669 = vsel %vm566, %v637, 0.0
        %v670 = vadd.f32 %v668, %v669
        %v671 = vsel %vm566, %v638, 0.0
        %v672 = vadd.f32 %v670, %v671
        %v673 = vsel %vm566, %v639, 0.0
        %v674 = vadd.f32 %v672, %v673
        %v675 = vsel %vm566, %v640, 0.0
        %v676 = vadd.f32 %v674, %v675
        %v677 = vsel %vm566, %v641, 0.0
        %v678 = vadd.f32 %v676, %v677
        %v679 = vsel %vm566, %v642, 0.0
        %v680 = vadd.f32 %v678, %v679
        %v681 = vsel %vm566, %v643, 0.0
        %v682 = vadd.f32 %v680, %v681
        %v683 = vsel %vm566, %v644, 0.0
        %v684 = vadd.f32 %v682, %v683
        %v685 = vsel %vm566, %v645, 0.0
        %v686 = vadd.f32 %v684, %v685
        %v687 = vsel %vm566, %v646, 0.0
        %v688 = vadd.f32 %v686, %v687
        %v689 = vsel %vm566, %v647, 0.0
        %v690 = vadd.f32 %v688, %v689
        %v691 = vsel %vm566, %v648, 0.0
        %v692 = vadd.f32 %v690, %v691
        %v693 = vsel %vm566, %v649, 0.0
        %v694 = vadd.f32 %v692, %v693
        %v695 = vsel %vm566, %v650, 0.0
        %v696 = vadd.f32 %v694, %v695
        %v697 = vsel %vm566, %v651, 0.0
        %v698 = vadd.f32 %v696, %v697
        %v699 = vsel %vm566, %v652, 0.0
        %v700 = vadd.f32 %v698, %v699
        %v701 = vsel %vm566, %v653, 0.0
        %v702 = vadd.f32 %v700, %v701
        %v703 = vsel %vm566, %v654, 0.0
        %v704 = vadd.f32 %v702, %v703
        %v705 = vsel %vm566, %v655, 0.0
        %v706 = vadd.f32 %v704, %v705
        %v707 = vsel %vm566, %v656, 0.0
        %v708 = vadd.f32 %v706, %v707
        %v709 = vsel %vm566, %v657, 0.0
        %v710 = vadd.f32 %v708, %v709
        %v711 = vsel %vm566, %v658, 0.0
        %v712 = vadd.f32 %v710, %v711
        %v713 = vsel %vm566, %v659, 0.0
        %v714 = vadd.f32 %v712, %v713
        %v715 = vsel %vm566, %v660, 0.0
        %v716 = vadd.f32 %v714, %v715
        %v717 = vsel %vm566, %v661, 0.0
        %v718 = vadd.f32 %v716, %v717
        %v719 = vsel %vm566, %v662, 0.0
        %v720 = vadd.f32 %v718, %v719
        %v721 = vsel %vm566, %v663, 0.0
        %v722 = vadd.f32 %v720, %v721
        %v723 = vsel %vm566, %v664, 0.0
        %v724 = vadd.f32 %v722, %v723
        %v725 = vsel %vm566, %v665, 0.0
        %v726 = vadd.f32 %v724, %v725
        %v727 = vsel %vm566, %v666, 0.0
        %v728 = vadd.f32 %v726, %v727
        %v729 = vsel %vm566, %v667, 0.0
        %v730 = vadd.f32 %v728, %v729
        %v731 = vrot.slane %v730, 4
        %v732 = vadd.f32 %v730, %v731
        %v733 = vrot.slane %v732, 2
        %v734 = vadd.f32 %v732, %v733
        %v735 = vrot.slane %v734, 1
        %v736 = vadd.f32 %v734, %v735
        %vm737 = vcmask 1040384
        %v738 = vsel %vm737, %v635, %v736
        %vm739 = vcmask 254976
        %740 = vst.msk [vmem:[%s233] sm:$0x3] %vm739, %v738
        %s741 = sand.u32 %s113, 1
        %s742 = scalar_lea.sflag [#allocation4], %s741
        %s743 = sand.u32 %s113, 1
        %s744 = smul.addr %s743, 2
        %s745 = scalar_lea.vmem [#allocation8], %s744
        // Predicated region
        $region45: #{deconv_block_forward.2} parent=31 // pred_check
          %p746 = pneg %p123
        $region46: #{deconv_block_forward.2} parent=31 // pred_check_branch
          %748 = sbr.rel (%p746) target = $region48
        $region47: #{deconv_block_forward.2} parent=31 // pred_region
          %s750 = ssub.s32 32, 32
          %751 = vsyncadd %s742, %s750
          %s752 = sadd.s32 %s26, %s25
          %s753 = smul.addr %s752, 32
          %s754 = scalar_lea.hbm %s3, %s753
          %s756 = sshll.u32 %s745, 4
          %s757 = int_to_ptr.vmem [resolvable:$true] %s756
          %759 = dma.vmem_to_hbm [thread:$0]  %s757, 32, %s754, %s742
        $region48: #{deconv_block_forward.2} parent=31 // pred_fallthru
          _
      $region32: #{deconv_block_forward.2} parent=5 // pred_fallthru
        _
      %p760 = scmp.le.s32.totalorder 2, %s16
      // Predicated region
      $region49: #{deconv_block_forward.2} parent=5 // pred_check
        %p761 = pneg %p760
      $region50: #{deconv_block_forward.2} parent=5 // pred_check_branch
        %763 = sbr.rel (%p761) target = $region52
      $region51: #{deconv_block_forward.2} parent=5 // pred_region
        %s764 = ssub.s32 %s16, 2
        // Predicated region
        $region53: #{deconv_block_forward.2} parent=51 // pred_check
          %p765 = pneg %p129
        $region54: #{deconv_block_forward.2} parent=51 // pred_check_branch
          %767 = sbr.rel (%p765) target = $region56
        $region55: #{deconv_block_forward.2} parent=51 // pred_region
          %s768 = sand.u32 %s114, 1
          %s769 = scalar_lea.sflag [#allocation4], %s768
          %s770 = sand.u32 %s114, 1
          %s771 = smul.addr %s770, 2
          %s772 = scalar_lea.vmem [#allocation8], %s771
          %773 = dma.done %s769, 32
        $region56: #{deconv_block_forward.2} parent=51 // pred_fallthru
          _
      $region52: #{deconv_block_forward.2} parent=5 // pred_fallthru
        _
    $region6: #{deconv_block_forward.2} parent=1 // loop_footer
      %s20 = sadd.s32 1, %s16
    $region7: #{deconv_block_forward.2} parent=1 // loop_footer_branch
      %15 = sbr.rel target = $region3
    $region8: #{deconv_block_forward.2} parent=1 // loop_exit
      _
    %774 = vsyncpa [#allocation3], 1
    %s775 = scalar_lea.sflag [#allocation3], 1
    %776 = vsyncpa %s775, 1
    %777 = vsyncpa [#allocation6], 1
    %778 = vsyncpa [#allocation4], 1
    %s779 = scalar_lea.sflag [#allocation4], 1
    %780 = vsyncpa %s779, 1

// kernel: deconv_block_forward.3
$region0: #{deconv_block_forward.3}
  #allocation0 [shape = 'u32[]', space=smem, size = 0x4, offset = 0x4, fixed_abs, tag = 'smem constant byte address 0x4 - core index']
  #allocation1 [shape = 'u32[144,128]{1,0:T(1,128)}', space=vmem, size = 0x12000, scoped, tag = 'internal scratch']
  %s0 = inlined_call_operand.hbm [shape: bf16[2,256,16], index: 0, kind: input, shape index: {}]
  %s1 = inlined_call_operand.hbm [shape: bf16[16,32], index: 1, kind: input, shape index: {}]
  %s2 = inlined_call_operand.hbm [shape: f32[1,32], index: 2, kind: input, shape index: {}]
  %s3 = inlined_call_operand.hbm [shape: f32[1,32], index: 3, kind: input, shape index: {}]
  %s4 = inlined_call_operand.hbm [shape: f32[2,256,32], index: 4, kind: output, shape index: {}]
  %s5 = sld [smem:[#allocation0]]
  $region65: #{deconv_block_forward.3} parent=0
    _
  %s7 = ssub.s32 1, %s5
  %s8 = scalar_select 0, %s7, %s5
  $region1: #{deconv_block_forward.3} parent=0
    #allocation2 [shape = 'u8[131072]{0}', space=vmem, size = 0x20000, scoped, tag = 'input window, operand 0']
    #allocation3 [shape = 's32[2]{0}', space=sflag, size = 0x8, scoped, tag = 'scoped memory for deconv_block_forward.3']
    #allocation4 [shape = 's32[2]{0}', space=sflag, size = 0x8, scoped, tag = 'scoped memory for deconv_block_forward.3']
    #allocation5 [shape = 'u8[4096]{0}', space=vmem, size = 0x1000, scoped, tag = 'input window, operand 1, single buffered']
    #allocation6 [shape = 's32[1]{0}', space=sflag, size = 0x4, scoped, tag = 'scoped memory for deconv_block_forward.3']
    #allocation7 [shape = 'u8[512]{0}', space=vmem, size = 0x400, scoped, tag = 'input window, operand 2, single buffered']
    #allocation8 [shape = 'u8[512]{0}', space=vmem, size = 0x400, scoped, tag = 'input window, operand 3, single buffered']
    #allocation9 [shape = 's32[1]{0}', space=sflag, size = 0x4, scoped, tag = 'scoped memory for deconv_block_forward.3']
    #allocation10 [shape = 'u8[262144]{0}', space=vmem, size = 0x40000, scoped, tag = 'output window, operand 0']
    %9 = vsyncpa [#allocation3], 0
    %s10 = scalar_lea.sflag [#allocation3], 1
    %11 = vsyncpa %s10, 0
    %12 = vsyncpa [#allocation6], 0
    %13 = vsyncpa [#allocation9], 0
    %14 = vsyncpa [#allocation4], 0
    %s15 = scalar_lea.sflag [#allocation4], 1
    %16 = vsyncpa %s15, 0
    loop: start=0, step=1, limit=4
    $region2: #{deconv_block_forward.3} parent=1 // loop_pre_header
      _
    $region3: #{deconv_block_forward.3} parent=1 // loop_header
      %s18 = sphi 0, %s22
      %p19 = scmp.ge.s32.totalorder %s18, 4
      %s25 = sphi 0, %s37
      %s26 = sphi 0, %s33
      %s27 = sphi 0, %s25
      %s28 = sphi 0, %s26
      %s29 = sphi 0, %s27
      %s30 = sphi 0, %s28
      %s42 = sphi 0, %s44
      %s45 = sphi 0, %s42
      %s46 = sphi 0, %s45
      %s62 = sphi 0, %s46
      %s66 = sphi 0, %s66
      %s68 = sphi 0, %s66
      %s69 = sphi 0, %s68
      %s83 = sphi 0, %s69
      %s87 = sphi 0, %s87
      %s89 = sphi 0, %s87
      %s90 = sphi 0, %s89
      %s104 = sphi 0, %s90
      %s108 = sphi 0, %s108
      %s110 = sphi 0, %s108
      %s111 = sphi 0, %s110
      %s125 = sphi 0, %s111
      %s133 = sphi 0, %s135
      %s136 = sphi 0, %s133
      %s137 = sphi 0, %s136
      %s153 = sphi 0, %s137
    $region4: #{deconv_block_forward.3} parent=1 // loop_header_branch
      %21 = sbr.rel (%p19) target = $region8
    $region5: #{deconv_block_forward.3} parent=1 // loop_body
      %s23 = ssub.s32 %s18, 1
      %s24 = ssub.s32 %s18, 2
      %s31 = sadd.s32 1, %s26
      %p32 = scmp.ge.s32.totalorder %s31, 1
      %s33 = scalar_select %p32, 0, %s31
      %s34 = sadd.s32 1, %s25
      %s35 = scalar_select %p32, %s34, %s25
      %p36 = scmp.ge.s32.totalorder %s35, 2
      %s37 = scalar_select %p36, 0, %s35
      %s38 = ssub.s32 %s25, %s37
      %s39 = ssub.s32 %s26, %s33
      %s40 = sor.u32 %s38, %s39
      %p41 = scmp.eq.s32.totalorder %s40, 0
      %s43 = sadd.s32 %s42, 1
      %s44 = scalar_select %p41, %s42, %s43
      %p47 = pneg %p41
      %p48 = scmp.eq.s32.totalorder %s18, 1
      %p49 = por %p47, %p48
      %p50 = scmp.ne.s32.totalorder %s42, %s45
      %p51 = scmp.eq.s32.totalorder %s18, 0
      %p52 = por %p50, %p51
      %p53 = scmp.ne.s32.totalorder %s42, %s45
      %p54 = scmp.eq.s32.totalorder %s23, 1
      %p55 = por %p53, %p54
      %p56 = scmp.ne.s32.totalorder %s45, %s46
      %p57 = scmp.eq.s32.totalorder %s23, 0
      %p58 = por %p56, %p57
      %p59 = scmp.ne.s32.totalorder %s45, %s46
      %p60 = scmp.eq.s32.totalorder %s24, 1
      %p61 = por %p59, %p60
      %p63 = scmp.ne.s32.totalorder %s46, %s62
      %p64 = scmp.eq.s32.totalorder %s24, 0
      %p65 = por %p63, %p64
      %s67 = sadd.s32 %s66, 1
      %p70 = scmp.eq.s32.totalorder %s18, 1
      %p71 = scmp.ne.s32.totalorder %s66, %s68
      %p72 = scmp.eq.s32.totalorder %s18, 0
      %p73 = por %p71, %p72
      %p74 = scmp.ne.s32.totalorder %s66, %s68
      %p75 = scmp.eq.s32.totalorder %s23, 1
      %p76 = por %p74, %p75
      %p77 = scmp.ne.s32.totalorder %s68, %s69
      %p78 = scmp.eq.s32.totalorder %s23, 0
      %p79 = por %p77, %p78
      %p80 = scmp.ne.s32.totalorder %s68, %s69
      %p81 = scmp.eq.s32.totalorder %s24, 1
      %p82 = por %p80, %p81
      %p84 = scmp.ne.s32.totalorder %s69, %s83
      %p85 = scmp.eq.s32.totalorder %s24, 0
      %p86 = por %p84, %p85
      %s88 = sadd.s32 %s87, 1
      %p91 = scmp.eq.s32.totalorder %s18, 1
      %p92 = scmp.ne.s32.totalorder %s87, %s89
      %p93 = scmp.eq.s32.totalorder %s18, 0
      %p94 = por %p92, %p93
      %p95 = scmp.ne.s32.totalorder %s87, %s89
      %p96 = scmp.eq.s32.totalorder %s23, 1
      %p97 = por %p95, %p96
      %p98 = scmp.ne.s32.totalorder %s89, %s90
      %p99 = scmp.eq.s32.totalorder %s23, 0
      %p100 = por %p98, %p99
      %p101 = scmp.ne.s32.totalorder %s89, %s90
      %p102 = scmp.eq.s32.totalorder %s24, 1
      %p103 = por %p101, %p102
      %p105 = scmp.ne.s32.totalorder %s90, %s104
      %p106 = scmp.eq.s32.totalorder %s24, 0
      %p107 = por %p105, %p106
      %s109 = sadd.s32 %s108, 1
      %p112 = scmp.eq.s32.totalorder %s18, 1
      %p113 = scmp.ne.s32.totalorder %s108, %s110
      %p114 = scmp.eq.s32.totalorder %s18, 0
      %p115 = por %p113, %p114
      %p116 = scmp.ne.s32.totalorder %s108, %s110
      %p117 = scmp.eq.s32.totalorder %s23, 1
      %p118 = por %p116, %p117
      %p119 = scmp.ne.s32.totalorder %s110, %s111
      %p120 = scmp.eq.s32.totalorder %s23, 0
      %p121 = por %p119, %p120
      %p122 = scmp.ne.s32.totalorder %s110, %s111
      %p123 = scmp.eq.s32.totalorder %s24, 1
      %p124 = por %p122, %p123
      %p126 = scmp.ne.s32.totalorder %s111, %s125
      %p127 = scmp.eq.s32.totalorder %s24, 0
      %p128 = por %p126, %p127
      %s129 = ssub.s32 %s25, %s37
      %s130 = ssub.s32 %s26, %s33
      %s131 = sor.u32 %s129, %s130
      %p132 = scmp.eq.s32.totalorder %s131, 0
      %s134 = sadd.s32 %s133, 1
      %s135 = scalar_select %p132, %s133, %s134
      %p138 = pneg %p132
      %p139 = scmp.eq.s32.totalorder %s18, 1
      %p140 = por %p138, %p139
      %p141 = scmp.ne.s32.totalorder %s133, %s136
      %p142 = scmp.eq.s32.totalorder %s18, 0
      %p143 = por %p141, %p142
      %p144 = scmp.ne.s32.totalorder %s133, %s136
      %p145 = scmp.eq.s32.totalorder %s23, 1
      %p146 = por %p144, %p145
      %p147 = scmp.ne.s32.totalorder %s136, %s137
      %p148 = scmp.eq.s32.totalorder %s23, 0
      %p149 = por %p147, %p148
      %p150 = scmp.ne.s32.totalorder %s136, %s137
      %p151 = scmp.eq.s32.totalorder %s24, 1
      %p152 = por %p150, %p151
      %p154 = scmp.ne.s32.totalorder %s137, %s153
      %p155 = scmp.eq.s32.totalorder %s24, 0
      %p156 = por %p154, %p155
      %p157 = scmp.le.s32.totalorder 1, %s18
      %p158 = scmp.lt.s32.totalorder %s18, 3
      %p159 = pnand %p157, %p158
      %p160 = pneg %p159
      // Predicated region
      $region9: #{deconv_block_forward.3} parent=5 // pred_check
        _
      $region10: #{deconv_block_forward.3} parent=5 // pred_check_branch
        %162 = sbr.rel (%p159) target = $region12
      $region11: #{deconv_block_forward.3} parent=5 // pred_region
        %s163 = ssub.s32 %s18, 1
        // Predicated region
        $region13: #{deconv_block_forward.3} parent=11 // pred_check
          %p164 = pneg %p79
        $region14: #{deconv_block_forward.3} parent=11 // pred_check_branch
          %166 = sbr.rel (%p164) target = $region16
        $region15: #{deconv_block_forward.3} parent=11 // pred_region
          %s168 = ssub.s32 128, 128
          %169 = vsyncadd [#allocation6], %s168
          %s170 = sshll.u32 [#allocation5], 4
          %s171 = int_to_ptr.vmem [resolvable:$true] %s170
          %176 = dma.hbm_to_vmem [thread:$0]  %s1, 128, %s171, [#allocation6], 64, 64, 4
        $region16: #{deconv_block_forward.3} parent=11 // pred_fallthru
          _
        // Predicated region
        $region17: #{deconv_block_forward.3} parent=11 // pred_check
          %p177 = pneg %p100
        $region18: #{deconv_block_forward.3} parent=11 // pred_check_branch
          %179 = sbr.rel (%p177) target = $region20
        $region19: #{deconv_block_forward.3} parent=11 // pred_region
          %s181 = ssub.s32 16, 16
          %182 = vsyncadd [#allocation6], %s181
          %s184 = sshll.u32 [#allocation7], 4
          %s185 = int_to_ptr.vmem [resolvable:$true] %s184
          %187 = dma.hbm_to_vmem [thread:$0]  %s2, 16, %s185, [#allocation6]
        $region20: #{deconv_block_forward.3} parent=11 // pred_fallthru
          _
        // Predicated region
        $region21: #{deconv_block_forward.3} parent=11 // pred_check
          %p188 = pneg %p121
        $region22: #{deconv_block_forward.3} parent=11 // pred_check_branch
          %190 = sbr.rel (%p188) target = $region24
        $region23: #{deconv_block_forward.3} parent=11 // pred_region
          %s192 = ssub.s32 16, 16
          %193 = vsyncadd [#allocation9], %s192
          %s195 = sshll.u32 [#allocation8], 4
          %s196 = int_to_ptr.vmem [resolvable:$true] %s195
          %198 = dma.hbm_to_vmem [thread:$0]  %s3, 16, %s196, [#allocation9]
        $region24: #{deconv_block_forward.3} parent=11 // pred_fallthru
          _
      $region12: #{deconv_block_forward.3} parent=5 // pred_fallthru
        _
      %p199 = scmp.lt.s32.totalorder %s18, 2
      // Predicated region
      $region25: #{deconv_block_forward.3} parent=5 // pred_check
        %p200 = pneg %p199
      $region26: #{deconv_block_forward.3} parent=5 // pred_check_branch
        %202 = sbr.rel (%p200) target = $region28
      $region27: #{deconv_block_forward.3} parent=5 // pred_region
        // Predicated region
        $region29: #{deconv_block_forward.3} parent=27 // pred_check
          %p203 = pneg %p52
        $region30: #{deconv_block_forward.3} parent=27 // pred_check_branch
          %205 = sbr.rel (%p203) target = $region32
        $region31: #{deconv_block_forward.3} parent=27 // pred_region
          %s206 = sand.u32 %s42, 1
          %s207 = scalar_lea.sflag [#allocation3], %s206
          %s208 = sand.u32 %s42, 1
          %s209 = smul.addr %s208, 128
          %s210 = scalar_lea.vmem [#allocation2], %s209
          %s211 = smul.u32 32, %s26
          %s213 = ssub.s32 2048, 2048
          %214 = vsyncadd %s207, %s213
          %s215 = smul.addr %s25, 32
          %s216 = sadd.s32 %s211, %s215
          %s217 = smul.addr %s216, 64
          %s218 = scalar_lea.hbm %s0, %s217
          %s219 = sshll.u32 %s210, 4
          %s220 = int_to_ptr.vmem [resolvable:$true] %s219
          %225 = dma.hbm_to_vmem [thread:$0]  %s218, 2048, %s220, %s207, 64, 64, 4
        $region32: #{deconv_block_forward.3} parent=27 // pred_fallthru
          _
      $region28: #{deconv_block_forward.3} parent=5 // pred_fallthru
        _
      %p226 = scmp.le.s32.totalorder 1, %s18
      %p227 = scmp.lt.s32.totalorder %s18, 3
      %p228 = pnand %p226, %p227
      %p229 = pneg %p228
      // Predicated region
      $region33: #{deconv_block_forward.3} parent=5 // pred_check
        _
      $region34: #{deconv_block_forward.3} parent=5 // pred_check_branch
        %231 = sbr.rel (%p228) target = $region36
      $region35: #{deconv_block_forward.3} parent=5 // pred_region
        %s232 = ssub.s32 %s18, 1
        %s233 = sand.u32 %s45, 1
        %s234 = scalar_lea.sflag [#allocation3], %s233
        %s235 = sand.u32 %s45, 1
        %s236 = smul.addr %s235, 128
        %s237 = scalar_lea.vmem [#allocation2], %s236
        // Predicated region
        $region37: #{deconv_block_forward.3} parent=35 // pred_check
          %p238 = pneg %p58
        $region38: #{deconv_block_forward.3} parent=35 // pred_check_branch
          %240 = sbr.rel (%p238) target = $region40
        $region39: #{deconv_block_forward.3} parent=35 // pred_region
          %241 = dma.done %s234, 2048
        $region40: #{deconv_block_forward.3} parent=35 // pred_fallthru
          _
        // Predicated region
        $region41: #{deconv_block_forward.3} parent=35 // pred_check
          %p242 = pneg %p79
        $region42: #{deconv_block_forward.3} parent=35 // pred_check_branch
          %244 = sbr.rel (%p242) target = $region44
        $region43: #{deconv_block_forward.3} parent=35 // pred_region
          %245 = dma.done [#allocation6], 128
        $region44: #{deconv_block_forward.3} parent=35 // pred_fallthru
          _
        // Predicated region
        $region45: #{deconv_block_forward.3} parent=35 // pred_check
          %p246 = pneg %p100
        $region46: #{deconv_block_forward.3} parent=35 // pred_check_branch
          %248 = sbr.rel (%p246) target = $region48
        $region47: #{deconv_block_forward.3} parent=35 // pred_region
          %249 = dma.done [#allocation6], 16
        $region48: #{deconv_block_forward.3} parent=35 // pred_fallthru
          _
        // Predicated region
        $region49: #{deconv_block_forward.3} parent=35 // pred_check
          %p250 = pneg %p121
        $region50: #{deconv_block_forward.3} parent=35 // pred_check_branch
          %252 = sbr.rel (%p250) target = $region52
        $region51: #{deconv_block_forward.3} parent=35 // pred_region
          %253 = dma.done [#allocation9], 16
        $region52: #{deconv_block_forward.3} parent=35 // pred_fallthru
          _
        %s254 = sand.u32 %s45, 1
        %s255 = scalar_lea.sflag [#allocation3], %s254
        %s256 = sand.u32 %s45, 1
        %s257 = smul.addr %s256, 128
        %s258 = scalar_lea.vmem [#allocation2], %s257
        %p259 = pneg %p58
        %p260 = pneg %p55
        %p261 = pneg %p79
        %p262 = pneg %p76
        %p263 = pneg %p100
        %p264 = pneg %p97
        %p265 = pneg %p121
        %p266 = pneg %p118
        %p267 = pneg %p149
        %p268 = pneg %p146
        %s269 = sand.u32 %s136, 1
        %s270 = scalar_lea.sflag [#allocation4], %s269
        %s271 = sand.u32 %s136, 1
        %s272 = smul.addr %s271, 256
        %s273 = scalar_lea.vmem [#allocation10], %s272
        %s274 = smul.u32 32, %s28
        %s275 = smul.u32 32, %s28
        %v277 = vld [vmem:[%s237] sm:$0xf]
        %v278 = vld [vmem:[%s237 + $0x4] sm:$0xf]
        %v279 = vld [vmem:[%s237 + $0x8] sm:$0xf]
        %v280 = vld [vmem:[%s237 + $0xc] sm:$0xf]
        %v281 = vld [vmem:[%s237 + $0x10] sm:$0xf]
        %v282 = vld [vmem:[%s237 + $0x14] sm:$0xf]
        %v283 = vld [vmem:[%s237 + $0x18] sm:$0xf]
        %v284 = vld [vmem:[%s237 + $0x1c] sm:$0xf]
        %v285 = vld [vmem:[%s237 + $0x20] sm:$0xf]
        %v286 = vld [vmem:[%s237 + $0x24] sm:$0xf]
        %v287 = vld [vmem:[%s237 + $0x28] sm:$0xf]
        %v288 = vld [vmem:[%s237 + $0x2c] sm:$0xf]
        %v289 = vld [vmem:[%s237 + $0x30] sm:$0xf]
        %v290 = vld [vmem:[%s237 + $0x34] sm:$0xf]
        %v291 = vld [vmem:[%s237 + $0x38] sm:$0xf]
        %v292 = vld [vmem:[%s237 + $0x3c] sm:$0xf]
        %v293 = vld [vmem:[%s237 + $0x40] sm:$0xf]
        %v294 = vld [vmem:[%s237 + $0x44] sm:$0xf]
        %v295 = vld [vmem:[%s237 + $0x48] sm:$0xf]
        %v296 = vld [vmem:[%s237 + $0x4c] sm:$0xf]
        %v297 = vld [vmem:[%s237 + $0x50] sm:$0xf]
        %v298 = vld [vmem:[%s237 + $0x54] sm:$0xf]
        %v299 = vld [vmem:[%s237 + $0x58] sm:$0xf]
        %v300 = vld [vmem:[%s237 + $0x5c] sm:$0xf]
        %v301 = vld [vmem:[%s237 + $0x60] sm:$0xf]
        %v302 = vld [vmem:[%s237 + $0x64] sm:$0xf]
        %v303 = vld [vmem:[%s237 + $0x68] sm:$0xf]
        %v304 = vld [vmem:[%s237 + $0x6c] sm:$0xf]
        %v305 = vld [vmem:[%s237 + $0x70] sm:$0xf]
        %v306 = vld [vmem:[%s237 + $0x74] sm:$0xf]
        %v307 = vld [vmem:[%s237 + $0x78] sm:$0xf]
        %v308 = vld [vmem:[%s237 + $0x7c] sm:$0xf]
        %v309 = vld [vmem:[#allocation5] sm:$0xf]
        %v310 = vld [vmem:[#allocation5 + $0x4] sm:$0xf]
        %v343 = vunpack.c.l.b16 %v277
        %v344 = vunpack.c.l.b16 %v278
        %v345 = vunpack.c.l.b16 %v279
        %v346 = vunpack.c.l.b16 %v280
        %v347 = vunpack.c.l.b16 %v281
        %v348 = vunpack.c.l.b16 %v282
        %v349 = vunpack.c.l.b16 %v283
        %v350 = vunpack.c.l.b16 %v284
        %v351 = vunpack.c.l.b16 %v285
        %v352 = vunpack.c.l.b16 %v286
        %v353 = vunpack.c.l.b16 %v287
        %v354 = vunpack.c.l.b16 %v288
        %v355 = vunpack.c.l.b16 %v289
        %v356 = vunpack.c.l.b16 %v290
        %v357 = vunpack.c.l.b16 %v291
        %v358 = vunpack.c.l.b16 %v292
        %v359 = vunpack.c.l.b16 %v293
        %v360 = vunpack.c.l.b16 %v294
        %v361 = vunpack.c.l.b16 %v295
        %v362 = vunpack.c.l.b16 %v296
        %v363 = vunpack.c.l.b16 %v297
        %v364 = vunpack.c.l.b16 %v298
        %v365 = vunpack.c.l.b16 %v299
        %v366 = vunpack.c.l.b16 %v300
        %v367 = vunpack.c.l.b16 %v301
        %v368 = vunpack.c.l.b16 %v302
        %v369 = vunpack.c.l.b16 %v303
        %v370 = vunpack.c.l.b16 %v304
        %v371 = vunpack.c.l.b16 %v305
        %v372 = vunpack.c.l.b16 %v306
        %v373 = vunpack.c.l.b16 %v307
        %v374 = vunpack.c.l.b16 %v308
        %v375 = vpack.c.b16 %v344, %v343
        %v376 = vpack.c.b16 %v346, %v345
        %v377 = vpack.c.b16 %v348, %v347
        %v378 = vpack.c.b16 %v350, %v349
        %v379 = vpack.c.b16 %v352, %v351
        %v380 = vpack.c.b16 %v354, %v353
        %v381 = vpack.c.b16 %v356, %v355
        %v382 = vpack.c.b16 %v358, %v357
        %v383 = vpack.c.b16 %v360, %v359
        %v384 = vpack.c.b16 %v362, %v361
        %v385 = vpack.c.b16 %v364, %v363
        %v386 = vpack.c.b16 %v366, %v365
        %v387 = vpack.c.b16 %v368, %v367
        %v388 = vpack.c.b16 %v370, %v369
        %v389 = vpack.c.b16 %v372, %v371
        %v390 = vpack.c.b16 %v374, %v373
        %v393 = vunpack.c.l.b16 %v309
        %v394 = vunpack.c.l.b16 %v310
        %v395 = vpack.c.b16 %v394, %v393
        %vm397 = vcmask 130048
        %v399 = vsel %vm397, %v375, 0
        %v402 = vsel %vm397, %v376, 0
        %v405 = vsel %vm397, %v377, 0
        %v408 = vsel %vm397, %v378, 0
        %v411 = vsel %vm397, %v379, 0
        %v414 = vsel %vm397, %v380, 0
        %v417 = vsel %vm397, %v381, 0
        %v420 = vsel %vm397, %v382, 0
        %v423 = vsel %vm397, %v383, 0
        %v426 = vsel %vm397, %v384, 0
        %v429 = vsel %vm397, %v385, 0
        %v432 = vsel %vm397, %v386, 0
        %v435 = vsel %vm397, %v387, 0
        %v438 = vsel %vm397, %v388, 0
        %v441 = vsel %vm397, %v389, 0
        %v444 = vsel %vm397, %v390, 0
        %446 = vmatprep.subr.bf16.mxu0 0
        %447 = vmatpush1.bf16.msra.mxu0 %v395
        %448 = vmatprep.subr.bf16.mxu0 0
        %449 = vmatpush1.bf16.msra.mxu0 0
        %450 = vmatprep.subr.bf16.mxu0 0
        %451 = vmatpush1.bf16.msra.mxu0 0
        %452 = vmatprep.subr.bf16.mxu0 0
        %453 = vmatpush1.bf16.msra.mxu0 0
        %454 = vmatprep.subr.bf16.mxu0 0
        %455 = vmatpush1.bf16.msra.mxu0 0
        %456 = vmatprep.subr.bf16.mxu0 0
        %457 = vmatpush1.bf16.msra.mxu0 0
        %458 = vmatprep.subr.bf16.mxu0 0
        %459 = vmatpush1.bf16.msra.mxu0 0
        %460 = vmatprep.subr.bf16.mxu0 0
        %461 = vmatpush1.bf16.msra.mxu0 0
        %462 = vmatprep.subr.bf16.mxu0 0
        %463 = vmatpush1.bf16.msra.mxu0 0
        %464 = vmatprep.subr.bf16.mxu0 0
        %465 = vmatpush1.bf16.msra.mxu0 0
        %466 = vmatprep.subr.bf16.mxu0 0
        %467 = vmatpush1.bf16.msra.mxu0 0
        %468 = vmatprep.subr.bf16.mxu0 0
        %469 = vmatpush1.bf16.msra.mxu0 0
        %470 = vmatprep.subr.bf16.mxu0 0
        %471 = vmatpush1.bf16.msra.mxu0 0
        %472 = vmatprep.subr.bf16.mxu0 0
        %473 = vmatpush1.bf16.msra.mxu0 0
        %474 = vmatprep.subr.bf16.mxu0 0
        %475 = vmatpush1.bf16.msra.mxu0 0
        %476 = vmatprep.subr.bf16.mxu0 0
        %477 = vmatpush1.bf16.msra.mxu0 0
        %478 = vmatprep.mubr.bf16.mxu0 0
        %479 = vmatmul.mubr.bf16.gmra.mrb[0].mxu0 %v399
        %v480 = vpop.f32.mrb[0].mxu0
        %v481 = vadd.f32 0.0, %v480
        %v482 = vpop.f32.mrb[0].mxu0
        %v483 = vpop.f32.mrb[0].mxu0
        %v484 = vadd.f32 0.0, %v483
        %v485 = vpop.f32.mrb[0].mxu0
        %486 = vmatprep.mubr.bf16.mxu0 0
        %487 = vmatmul.mubr.bf16.gmra.mrb[0].mxu0 %v402
        %v488 = vpop.f32.mrb[0].mxu0
        %v489 = vadd.f32 0.0, %v488
        %v490 = vpop.f32.mrb[0].mxu0
        %v491 = vpop.f32.mrb[0].mxu0
        %v492 = vadd.f32 0.0, %v491
        %v493 = vpop.f32.mrb[0].mxu0
        %494 = vmatprep.mubr.bf16.mxu0 0
        %495 = vmatmul.mubr.bf16.gmra.mrb[0].mxu0 %v405
        %v496 = vpop.f32.mrb[0].mxu0
        %v497 = vadd.f32 0.0, %v496
        %v498 = vpop.f32.mrb[0].mxu0
        %v499 = vpop.f32.mrb[0].mxu0
        %v500 = vadd.f32 0.0, %v499
        %v501 = vpop.f32.mrb[0].mxu0
        %502 = vmatprep.mubr.bf16.mxu0 0
        %503 = vmatmul.mubr.bf16.gmra.mrb[0].mxu0 %v408
        %v504 = vpop.f32.mrb[0].mxu0
        %v505 = vadd.f32 0.0, %v504
        %v506 = vpop.f32.mrb[0].mxu0
        %v507 = vpop.f32.mrb[0].mxu0
        %v508 = vadd.f32 0.0, %v507
        %v509 = vpop.f32.mrb[0].mxu0
        %510 = vmatprep.mubr.bf16.mxu0 0
        %511 = vmatmul.mubr.bf16.gmra.mrb[0].mxu0 %v411
        %v512 = vpop.f32.mrb[0].mxu0
        %v513 = vadd.f32 0.0, %v512
        %v514 = vpop.f32.mrb[0].mxu0
        %v515 = vpop.f32.mrb[0].mxu0
        %v516 = vadd.f32 0.0, %v515
        %v517 = vpop.f32.mrb[0].mxu0
        %518 = vmatprep.mubr.bf16.mxu0 0
        %519 = vmatmul.mubr.bf16.gmra.mrb[0].mxu0 %v414
        %v520 = vpop.f32.mrb[0].mxu0
        %v521 = vadd.f32 0.0, %v520
        %v522 = vpop.f32.mrb[0].mxu0
        %v523 = vpop.f32.mrb[0].mxu0
        %v524 = vadd.f32 0.0, %v523
        %v525 = vpop.f32.mrb[0].mxu0
        %526 = vmatprep.mubr.bf16.mxu0 0
        %527 = vmatmul.mubr.bf16.gmra.mrb[0].mxu0 %v417
        %v528 = vpop.f32.mrb[0].mxu0
        %v529 = vadd.f32 0.0, %v528
        %v530 = vpop.f32.mrb[0].mxu0
        %v531 = vpop.f32.mrb[0].mxu0
        %v532 = vadd.f32 0.0, %v531
        %v533 = vpop.f32.mrb[0].mxu0
        %534 = vmatprep.mubr.bf16.mxu0 0
        %535 = vmatmul.mubr.bf16.gmra.mrb[0].mxu0 %v420
        %v536 = vpop.f32.mrb[0].mxu0
        %v537 = vadd.f32 0.0, %v536
        %v538 = vpop.f32.mrb[0].mxu0
        %v539 = vpop.f32.mrb[0].mxu0
        %v540 = vadd.f32 0.0, %v539
        %v541 = vpop.f32.mrb[0].mxu0
        %542 = vmatprep.mubr.bf16.mxu0 0
        %543 = vmatmul.mubr.bf16.gmra.mrb[0].mxu0 %v423
        %v544 = vpop.f32.mrb[0].mxu0
        %v545 = vadd.f32 0.0, %v544
        %v546 = vpop.f32.mrb[0].mxu0
        %v547 = vpop.f32.mrb[0].mxu0
        %v548 = vadd.f32 0.0, %v547
        %v549 = vpop.f32.mrb[0].mxu0
        %550 = vmatprep.mubr.bf16.mxu0 0
        %551 = vmatmul.mubr.bf16.gmra.mrb[0].mxu0 %v426
        %v552 = vpop.f32.mrb[0].mxu0
        %v553 = vadd.f32 0.0, %v552
        %v554 = vpop.f32.mrb[0].mxu0
        %v555 = vpop.f32.mrb[0].mxu0
        %v556 = vadd.f32 0.0, %v555
        %v557 = vpop.f32.mrb[0].mxu0
        %558 = vmatprep.mubr.bf16.mxu0 0
        %559 = vmatmul.mubr.bf16.gmra.mrb[0].mxu0 %v429
        %v560 = vpop.f32.mrb[0].mxu0
        %v561 = vadd.f32 0.0, %v560
        %v562 = vpop.f32.mrb[0].mxu0
        %v563 = vpop.f32.mrb[0].mxu0
        %v564 = vadd.f32 0.0, %v563
        %v565 = vpop.f32.mrb[0].mxu0
        %566 = vmatprep.mubr.bf16.mxu0 0
        %567 = vmatmul.mubr.bf16.gmra.mrb[0].mxu0 %v432
        %v568 = vpop.f32.mrb[0].mxu0
        %v569 = vadd.f32 0.0, %v568
        %v570 = vpop.f32.mrb[0].mxu0
        %v571 = vpop.f32.mrb[0].mxu0
        %v572 = vadd.f32 0.0, %v571
        %v573 = vpop.f32.mrb[0].mxu0
        %574 = vmatprep.mubr.bf16.mxu0 0
        %575 = vmatmul.mubr.bf16.gmra.mrb[0].mxu0 %v435
        %v576 = vpop.f32.mrb[0].mxu0
        %v577 = vadd.f32 0.0, %v576
        %v578 = vpop.f32.mrb[0].mxu0
        %v579 = vpop.f32.mrb[0].mxu0
        %v580 = vadd.f32 0.0, %v579
        %v581 = vpop.f32.mrb[0].mxu0
        %582 = vmatprep.mubr.bf16.mxu0 0
        %583 = vmatmul.mubr.bf16.gmra.mrb[0].mxu0 %v438
        %v584 = vpop.f32.mrb[0].mxu0
        %v585 = vadd.f32 0.0, %v584
        %v586 = vpop.f32.mrb[0].mxu0
        %v587 = vpop.f32.mrb[0].mxu0
        %v588 = vadd.f32 0.0, %v587
        %v589 = vpop.f32.mrb[0].mxu0
        %590 = vmatprep.mubr.bf16.mxu0 0
        %591 = vmatmul.mubr.bf16.gmra.mrb[0].mxu0 %v441
        %v592 = vpop.f32.mrb[0].mxu0
        %v593 = vadd.f32 0.0, %v592
        %v594 = vpop.f32.mrb[0].mxu0
        %v595 = vpop.f32.mrb[0].mxu0
        %v596 = vadd.f32 0.0, %v595
        %v597 = vpop.f32.mrb[0].mxu0
        %598 = vmatprep.mubr.bf16.mxu0 0
        %599 = vmatmul.mubr.bf16.gmra.mrb[0].mxu0 %v444
        %v600 = vpop.f32.mrb[0].mxu0
        %v601 = vadd.f32 0.0, %v600
        %v602 = vpop.f32.mrb[0].mxu0
        %v603 = vpop.f32.mrb[0].mxu0
        %v604 = vadd.f32 0.0, %v603
        %v605 = vpop.f32.mrb[0].mxu0
        %606 = vdwg.mxu0
        %v607 = vld [vmem:[#allocation7] sm:$0x1]
        %v609 = vlaneseq
        %v610 = vshrl.u32 %v609, 7
        %v611 = vsub.s32 0, %v610
        %v612 = vrot.slane %v607, %v611
        %v614 = vmul.f32 %v481, %v612
        %v615 = vmul.f32 %v484, %v612
        %v616 = vmul.f32 %v489, %v612
        %v617 = vmul.f32 %v492, %v612
        %v618 = vmul.f32 %v497, %v612
        %v619 = vmul.f32 %v500, %v612
        %v620 = vmul.f32 %v505, %v612
        %v621 = vmul.f32 %v508, %v612
        %v622 = vmul.f32 %v513, %v612
        %v623 = vmul.f32 %v516, %v612
        %v624 = vmul.f32 %v521, %v612
        %v625 = vmul.f32 %v524, %v612
        %v626 = vmul.f32 %v529, %v612
        %v627 = vmul.f32 %v532, %v612
        %v628 = vmul.f32 %v537, %v612
        %v629 = vmul.f32 %v540, %v612
        %v630 = vmul.f32 %v545, %v612
        %v631 = vmul.f32 %v548, %v612
        %v632 = vmul.f32 %v553, %v612
        %v633 = vmul.f32 %v556, %v612
        %v634 = vmul.f32 %v561, %v612
        %v635 = vmul.f32 %v564, %v612
        %v636 = vmul.f32 %v569, %v612
        %v637 = vmul.f32 %v572, %v612
        %v638 = vmul.f32 %v577, %v612
        %v639 = vmul.f32 %v580, %v612
        %v640 = vmul.f32 %v585, %v612
        %v641 = vmul.f32 %v588, %v612
        %v642 = vmul.f32 %v593, %v612
        %v643 = vmul.f32 %v596, %v612
        %v644 = vmul.f32 %v601, %v612
        %v645 = vmul.f32 %v604, %v612
        %v646 = vld [vmem:[#allocation8] sm:$0x1]
        %v648 = vlaneseq
        %v649 = vshrl.u32 %v648, 7
        %v650 = vsub.s32 0, %v649
        %v651 = vrot.slane %v646, %v650
        %v653 = vadd.f32 %v614, %v651
        %v654 = vadd.f32 %v615, %v651
        %v655 = vadd.f32 %v616, %v651
        %v656 = vadd.f32 %v617, %v651
        %v657 = vadd.f32 %v618, %v651
        %v658 = vadd.f32 %v619, %v651
        %v659 = vadd.f32 %v620, %v651
        %v660 = vadd.f32 %v621, %v651
        %v661 = vadd.f32 %v622, %v651
        %v662 = vadd.f32 %v623, %v651
        %v663 = vadd.f32 %v624, %v651
        %v664 = vadd.f32 %v625, %v651
        %v665 = vadd.f32 %v626, %v651
        %v666 = vadd.f32 %v627, %v651
        %v667 = vadd.f32 %v628, %v651
        %v668 = vadd.f32 %v629, %v651
        %v669 = vadd.f32 %v630, %v651
        %v670 = vadd.f32 %v631, %v651
        %v671 = vadd.f32 %v632, %v651
        %v672 = vadd.f32 %v633, %v651
        %v673 = vadd.f32 %v634, %v651
        %v674 = vadd.f32 %v635, %v651
        %v675 = vadd.f32 %v636, %v651
        %v676 = vadd.f32 %v637, %v651
        %v677 = vadd.f32 %v638, %v651
        %v678 = vadd.f32 %v639, %v651
        %v679 = vadd.f32 %v640, %v651
        %v680 = vadd.f32 %v641, %v651
        %v681 = vadd.f32 %v642, %v651
        %v682 = vadd.f32 %v643, %v651
        %v683 = vadd.f32 %v644, %v651
        %v684 = vadd.f32 %v645, %v651
        %v685 = vmax.f32 %v653, 0.0
        %v686 = vmax.f32 %v654, 0.0
        %v687 = vmax.f32 %v655, 0.0
        %v688 = vmax.f32 %v656, 0.0
        %v689 = vmax.f32 %v657, 0.0
        %v690 = vmax.f32 %v658, 0.0
        %v691 = vmax.f32 %v659, 0.0
        %v692 = vmax.f32 %v660, 0.0
        %v693 = vmax.f32 %v661, 0.0
        %v694 = vmax.f32 %v662, 0.0
        %v695 = vmax.f32 %v663, 0.0
        %v696 = vmax.f32 %v664, 0.0
        %v697 = vmax.f32 %v665, 0.0
        %v698 = vmax.f32 %v666, 0.0
        %v699 = vmax.f32 %v667, 0.0
        %v700 = vmax.f32 %v668, 0.0
        %v701 = vmax.f32 %v669, 0.0
        %v702 = vmax.f32 %v670, 0.0
        %v703 = vmax.f32 %v671, 0.0
        %v704 = vmax.f32 %v672, 0.0
        %v705 = vmax.f32 %v673, 0.0
        %v706 = vmax.f32 %v674, 0.0
        %v707 = vmax.f32 %v675, 0.0
        %v708 = vmax.f32 %v676, 0.0
        %v709 = vmax.f32 %v677, 0.0
        %v710 = vmax.f32 %v678, 0.0
        %v711 = vmax.f32 %v679, 0.0
        %v712 = vmax.f32 %v680, 0.0
        %v713 = vmax.f32 %v681, 0.0
        %v714 = vmax.f32 %v682, 0.0
        %v715 = vmax.f32 %v683, 0.0
        %v716 = vmax.f32 %v684, 0.0
        %vm717 = vcmask 261120
        %718 = vst.msk [vmem:[%s273] sm:$0xff] %vm717, %v685
        %719 = vst.msk [vmem:[%s273 + $0x8] sm:$0xff] %vm717, %v686
        %720 = vst.msk [vmem:[%s273 + $0x10] sm:$0xff] %vm717, %v687
        %721 = vst.msk [vmem:[%s273 + $0x18] sm:$0xff] %vm717, %v688
        %722 = vst.msk [vmem:[%s273 + $0x20] sm:$0xff] %vm717, %v689
        %723 = vst.msk [vmem:[%s273 + $0x28] sm:$0xff] %vm717, %v690
        %724 = vst.msk [vmem:[%s273 + $0x30] sm:$0xff] %vm717, %v691
        %725 = vst.msk [vmem:[%s273 + $0x38] sm:$0xff] %vm717, %v692
        %726 = vst.msk [vmem:[%s273 + $0x40] sm:$0xff] %vm717, %v693
        %727 = vst.msk [vmem:[%s273 + $0x48] sm:$0xff] %vm717, %v694
        %728 = vst.msk [vmem:[%s273 + $0x50] sm:$0xff] %vm717, %v695
        %729 = vst.msk [vmem:[%s273 + $0x58] sm:$0xff] %vm717, %v696
        %730 = vst.msk [vmem:[%s273 + $0x60] sm:$0xff] %vm717, %v697
        %731 = vst.msk [vmem:[%s273 + $0x68] sm:$0xff] %vm717, %v698
        %732 = vst.msk [vmem:[%s273 + $0x70] sm:$0xff] %vm717, %v699
        %733 = vst.msk [vmem:[%s273 + $0x78] sm:$0xff] %vm717, %v700
        %734 = vst.msk [vmem:[%s273 + $0x80] sm:$0xff] %vm717, %v701
        %735 = vst.msk [vmem:[%s273 + $0x88] sm:$0xff] %vm717, %v702
        %736 = vst.msk [vmem:[%s273 + $0x90] sm:$0xff] %vm717, %v703
        %737 = vst.msk [vmem:[%s273 + $0x98] sm:$0xff] %vm717, %v704
        %738 = vst.msk [vmem:[%s273 + $0xa0] sm:$0xff] %vm717, %v705
        %739 = vst.msk [vmem:[%s273 + $0xa8] sm:$0xff] %vm717, %v706
        %740 = vst.msk [vmem:[%s273 + $0xb0] sm:$0xff] %vm717, %v707
        %741 = vst.msk [vmem:[%s273 + $0xb8] sm:$0xff] %vm717, %v708
        %742 = vst.msk [vmem:[%s273 + $0xc0] sm:$0xff] %vm717, %v709
        %743 = vst.msk [vmem:[%s273 + $0xc8] sm:$0xff] %vm717, %v710
        %744 = vst.msk [vmem:[%s273 + $0xd0] sm:$0xff] %vm717, %v711
        %745 = vst.msk [vmem:[%s273 + $0xd8] sm:$0xff] %vm717, %v712
        %746 = vst.msk [vmem:[%s273 + $0xe0] sm:$0xff] %vm717, %v713
        %747 = vst.msk [vmem:[%s273 + $0xe8] sm:$0xff] %vm717, %v714
        %748 = vst.msk [vmem:[%s273 + $0xf0] sm:$0xff] %vm717, %v715
        %749 = vst.msk [vmem:[%s273 + $0xf8] sm:$0xff] %vm717, %v716
        %s750 = sand.u32 %s136, 1
        %s751 = scalar_lea.sflag [#allocation4], %s750
        %s752 = sand.u32 %s136, 1
        %s753 = smul.addr %s752, 256
        %s754 = scalar_lea.vmem [#allocation10], %s753
        // Predicated region
        $region53: #{deconv_block_forward.3} parent=35 // pred_check
          %p755 = pneg %p146
        $region54: #{deconv_block_forward.3} parent=35 // pred_check_branch
          %757 = sbr.rel (%p755) target = $region56
        $region55: #{deconv_block_forward.3} parent=35 // pred_region
          %s758 = smul.u32 32, %s28
          %s760 = ssub.s32 4096, 4096
          %761 = vsyncadd %s751, %s760
          %s762 = smul.addr %s27, 32
          %s763 = sadd.s32 %s758, %s762
          %s764 = smul.addr %s763, 128
          %s765 = scalar_lea.hbm %s4, %s764
          %s766 = sshll.u32 %s754, 4
          %s767 = int_to_ptr.vmem [resolvable:$true] %s766
          %772 = dma.vmem_to_hbm [thread:$0]  %s767, 4096, %s765, %s751, 128, 128, 8
        $region56: #{deconv_block_forward.3} parent=35 // pred_fallthru
          _
      $region36: #{deconv_block_forward.3} parent=5 // pred_fallthru
        _
      %p773 = scmp.le.s32.totalorder 2, %s18
      // Predicated region
      $region57: #{deconv_block_forward.3} parent=5 // pred_check
        %p774 = pneg %p773
      $region58: #{deconv_block_forward.3} parent=5 // pred_check_branch
        %776 = sbr.rel (%p774) target = $region60
      $region59: #{deconv_block_forward.3} parent=5 // pred_region
        %s777 = ssub.s32 %s18, 2
        // Predicated region
        $region61: #{deconv_block_forward.3} parent=59 // pred_check
          %p778 = pneg %p152
        $region62: #{deconv_block_forward.3} parent=59 // pred_check_branch
          %780 = sbr.rel (%p778) target = $region64
        $region63: #{deconv_block_forward.3} parent=59 // pred_region
          %s781 = sand.u32 %s137, 1
          %s782 = scalar_lea.sflag [#allocation4], %s781
          %s783 = sand.u32 %s137, 1
          %s784 = smul.addr %s783, 256
          %s785 = scalar_lea.vmem [#allocation10], %s784
          %786 = dma.done %s782, 4096
        $region64: #{deconv_block_forward.3} parent=59 // pred_fallthru
          _
      $region60: #{deconv_block_forward.3} parent=5 // pred_fallthru
        _
    $region6: #{deconv_block_forward.3} parent=1 // loop_footer
      %s22 = sadd.s32 1, %s18
    $region7: #{deconv_block_forward.3} parent=1 // loop_footer_branch
      %17 = sbr.rel target = $region3
    $region8: #{deconv_block_forward.3} parent=1 // loop_exit
      _
    %787 = vsyncpa [#allocation3], 1
    %s788 = scalar_lea.sflag [#allocation3], 1
    %789 = vsyncpa %s788, 1
    %790 = vsyncpa [#allocation6], 1
    %791 = vsyncpa [#allocation9], 1
    %792 = vsyncpa [#allocation4], 1
    %s793 = scalar_lea.sflag [#allocation4], 1
    %794 = vsyncpa %s793, 1

</llo_original>
